<compile_context>
chip_gen: v7x
topology: tpu7x:2x2x1
jax: 0.10.0
libtpu: 0.0.40
codegen_flags: <defaults>
</compile_context>

<pallas_src>
import functools

import jax
import jax.numpy as jnp
from jax import lax
from jax.experimental import pallas as pl
from jax.experimental.pallas import tpu as pltpu

EPS = 1e-5  # nn.InstanceNorm2d default eps (affine=False, no running stats)


# --------------------------------------------------------------------------
# Banded conv weights: fold the kx (width) taps + width zero-padding into a
# (W*Ci, W*Co) matrix per ky so each conv is 3 lane-dense MXU matmuls.
# --------------------------------------------------------------------------
def _banded_conv_weight(w, W):
    """w: (3, 3, Ci, Co) HWIO  ->  (3, W*Ci, W*Co) with
       out[ky, xi*Ci + ci, xo*Co + co] = w[ky, xi - xo + 1, ci, co] if |xi-xo| <= 1
                                         else 0.
    A row-shifted lane-dense slab (rows, W*Ci) @ out[ky] performs the three kx
    taps (including SAME zero padding at the width borders) in one matmul.
    """
    _, _, Ci, Co = w.shape
    xi = jnp.arange(W)[:, None]
    xo = jnp.arange(W)[None, :]
    dx = xi - xo + 1                                         # (W, W)
    valid = ((dx >= 0) & (dx <= 2)).astype(w.dtype)
    dxc = jnp.clip(dx, 0, 2)
    blocks = w[:, dxc] * valid[None, :, :, None, None]       # (3, W, W, Ci, Co)
    return blocks.transpose(0, 1, 3, 2, 4).reshape(3, W * Ci, W * Co)


# --------------------------------------------------------------------------
# Pallas kernel: fused (conv3x3 -> InstanceNorm -> ReLU) x 2 for B images
# stacked along the matmul M axis (zero separator rows between images).
# --------------------------------------------------------------------------
def _double_conv_kernel(x_ref, w1_ref, w2_ref, out_ref, xpad_ref, mid_ref, *,
                        B, H, W, Cmid, Cout):
    # x_ref   : (B, H, K1)  bf16  lane-concat [x2-slab | x1-slab], no halo
    # w1_ref  : (3, K1, W*Cmid)   bf16 banded conv1 weights (K-stacked)
    # w2_ref  : (3, W*Cmid, W*Cout) bf16 banded conv2 weights
    # out_ref : (B, H, W*Cout)     (lane-dense: W*Cout is a multiple of 128)
    # xpad_ref: VMEM (B*(H+2), K1)      bf16 scratch (zero-separated input slab)
    # mid_ref : VMEM (B*(H+2), W*Cmid)  bf16 scratch (zero-separated conv1 out)
    Hp = H + 2
    M = B * Hp              # padded/stacked rows
    Mo = M - 2              # rows produced by the shifted banded matmuls
    inv_hw = 1.0 / (H * W)

    def lane_group_sum(rows, c):
        # rows: (r, W*c) f32. Per-channel totals broadcast back to every lane
        # of that channel using log2(W) circular lane rotations (XLU, cheap).
        shift = c
        while shift < W * c:
            rows = rows + pltpu.roll(rows, shift=shift, axis=1)
            shift *= 2
        return rows

    def inorm_relu(acc, c):
        # acc: (H, W*c) f32, one image. Single-pass stats: E[x], E[x^2]
        # reduced together through one roll chain; f32 accumulation.
        stats = jnp.concatenate(
            [jnp.sum(acc, axis=0, keepdims=True),
             jnp.sum(acc * acc, axis=0, keepdims=True)], axis=0)   # (2, W*c)
        stats = lane_group_sum(stats, c) * inv_hw
        mean = stats[0:1, :]
        var = stats[1:2, :] - mean * mean
        return jnp.maximum((acc - mean) * lax.rsqrt(var + EPS), 0.0)

    # ---- stage the unpadded input block into the zero-separated bf16 slab,
    # and zero the mid scratch's separator rows (interiors fully overwritten
    # each step; grid axis is 'parallel' so scratch is per-core).
    zero_in = jnp.zeros((1, xpad_ref.shape[1]), xpad_ref.dtype)
    zero_mid = jnp.zeros((1, mid_ref.shape[1]), mid_ref.dtype)
    for b in range(B):
        r0 = b * Hp
        xpad_ref[r0:r0 + 1, :] = zero_in
        xpad_ref[r0 + 1:r0 + 1 + H, :] = x_ref[b, :, :]
        xpad_ref[r0 + H + 1:r0 + H + 2, :] = zero_in
        mid_ref[r0:r0 + 1, :] = zero_mid
        mid_ref[r0 + H + 1:r0 + H + 2, :] = zero_mid

    # ---- conv1: 3 row-shifted banded matmuls over the whole stacked batch
    # (K = W*(Ca+Cb), bf16 MXU operands, f32 accumulation).
    acc1 = jnp.zeros((Mo, W * Cmid), jnp.float32)
    for ky in range(3):
        acc1 = acc1 + jnp.dot(xpad_ref[ky:ky + Mo, :], w1_ref[ky, :, :],
                              preferred_element_type=jnp.float32)

    # ---- per-image InstanceNorm + ReLU; bf16 mid written exactly once.
    for b in range(B):
        r0 = b * Hp
        y1 = inorm_relu(acc1[r0:r0 + H, :], Cmid)
        mid_ref[r0 + 1:r0 + 1 + H, :] = y1.astype(mid_ref.dtype)

    # ---- conv2: 3 row-shifted banded matmuls straight off the bf16 scratch.
    acc2 = jnp.zeros((Mo, W * Cout), jnp.float32)
    for ky in range(3):
        acc2 = acc2 + jnp.dot(mid_ref[ky:ky + Mo, :], w2_ref[ky, :, :],
                              preferred_element_type=jnp.float32)

    for b in range(B):
        r0 = b * Hp
        y2 = inorm_relu(acc2[r0:r0 + H, :], Cout)
        out_ref[b, :, :] = y2.astype(out_ref.dtype)


def double_conv_pallas(xa, xb, w1, w2, *, images_per_step=None,
                       out_dtype=jnp.float32):
    """Fused (conv3x3 -> InstanceNorm -> ReLU) x 2 over concat([xa, xb], ch).

    xa: (N, H, W, Ca) skip connection (x2), xb: (N, H, W, Cb) upsampled x1.
    w1: (3, 3, Ca+Cb, Cmid) HWIO, w2: (3, 3, Cmid, Cout) HWIO.
    images_per_step: images folded into one grid step (default: all N, i.e.
      grid=(1,), best for single-TC v5e/v6e; on v7x use ceil(N/2) so both
      TensorCores get a step). Returns (N, H, W, Cout) in out_dtype.
    """
    N, H, W, Ca = xa.shape
    Cb = xb.shape[-1]
    Cmid, Cout = w1.shape[-1], w2.shape[-1]
    assert w1.shape[2] == Ca + Cb and w2.shape[2] == Cmid
    assert W & (W - 1) == 0, "W must be a power of two for the lane roll-reduce"

    B = N if images_per_step is None else images_per_step
    assert N % B == 0, "images_per_step must divide the batch"
    steps = N // B

    # Lane-dense bf16 slabs, block-concatenated along lanes (no channel
    # interleave, no wrapper-side halo pad): (N, H, W*Ca + W*Cb).
    x = jnp.concatenate(
        [xa.reshape(N, H, W * Ca), xb.reshape(N, H, W * Cb)],
        axis=-1).astype(jnp.bfloat16)
    K1 = W * (Ca + Cb)

    # conv over the channel concat == sum of convs over the two parts; stack
    # the two banded weights along K so conv1 is one matmul per ky.
    w1b = jnp.concatenate(
        [_banded_conv_weight(w1[:, :, :Ca, :], W),
         _banded_conv_weight(w1[:, :, Ca:, :], W)],
        axis=1).astype(jnp.bfloat16)                       # (3, K1, W*Cmid)
    w2b = _banded_conv_weight(w2, W).astype(jnp.bfloat16)  # (3, W*Cmid, W*Cout)

    kernel = functools.partial(_double_conv_kernel,
                               B=B, H=H, W=W, Cmid=Cmid, Cout=Cout)

    out = pl.pallas_call(
        kernel,
        out_shape=jax.ShapeDtypeStruct((N, H, W * Cout), out_dtype),
        grid_spec=pltpu.PrefetchScalarGridSpec(
            num_scalar_prefetch=0,
            grid=(steps,),
            in_specs=[
                pl.BlockSpec((B, H, K1), lambda s: (s, 0, 0)),
                pl.BlockSpec((3, K1, W * Cmid), lambda s: (0, 0, 0)),
                pl.BlockSpec((3, W * Cmid, W * Cout), lambda s: (0, 0, 0)),
            ],
            out_specs=pl.BlockSpec((B, H, W * Cout), lambda s: (s, 0, 0)),
            scratch_shapes=[
                pltpu.VMEM((B * (H + 2), K1), jnp.bfloat16),
                pltpu.VMEM((B * (H + 2), W * Cmid), jnp.bfloat16),
            ],
        ),
        compiler_params=pltpu.CompilerParams(
            dimension_semantics=("parallel",),
        ),
    )(x, w1b, w2b)
    return out.reshape(N, H, W, Cout)


# --------------------------------------------------------------------------
# Glue (plain JAX): bilinear 2x upsample (align_corners=True) + border pad
# --------------------------------------------------------------------------
def upsample2x_bilinear_align_corners(x):
    """x: (N, H, W, C) -> (N, 2H, 2W, C), matches torch Upsample(align_corners=True)."""
    N, H, W, C = x.shape
    Ho, Wo = 2 * H, 2 * W

    def coords(n_in, n_out):
        if n_in == 1:
            src = jnp.zeros((n_out,), jnp.float32)
        else:
            src = jnp.arange(n_out, dtype=jnp.float32) * (n_in - 1) / (n_out - 1)
        i0 = jnp.clip(jnp.floor(src).astype(jnp.int32), 0, n_in - 1)
        i1 = jnp.minimum(i0 + 1, n_in - 1)
        frac = src - i0.astype(jnp.float32)
        return i0, i1, frac

    y0, y1, wy = coords(H, Ho)
    x0, x1, wx = coords(W, Wo)
    rows = (x[:, y0] * (1.0 - wy)[None, :, None, None]
            + x[:, y1] * wy[None, :, None, None])             # (N, Ho, W, C)
    out = (rows[:, :, x0] * (1.0 - wx)[None, None, :, None]
           + rows[:, :, x1] * wx[None, None, :, None])        # (N, Ho, Wo, C)
    return out


def up_forward(x1, x2, w1, w2):
    """x1: (N, H1, W1, C1) low-res path (NHWC), x2: (N, H2, W2, C2) skip (NHWC)."""
    x1u = upsample2x_bilinear_align_corners(x1)
    diffY = x2.shape[1] - x1u.shape[1]
    diffX = x2.shape[2] - x1u.shape[2]
    x1u = jnp.pad(x1u, ((0, 0),
                        (diffY // 2, diffY - diffY // 2),
                        (diffX // 2, diffX - diffX // 2),
                        (0, 0)))
    # torch.cat([x2, x1], dim=1): x2 channels first; the concat is folded into
    # the kernel (lane-concat slab + K-stacked banded weights).
    return double_conv_pallas(x2, x1u, w1, w2)


# --------------------------------------------------------------------------
# Pure-JAX reference (mirrors the kernel's bf16 MXU operand quantization)
# --------------------------------------------------------------------------
def _ref_forward(x1, x2, w1, w2):
    x1u = upsample2x_bilinear_align_corners(x1)
    diffY = x2.shape[1] - x1u.shape[1]
    diffX = x2.shape[2] - x1u.shape[2]
    x1u = jnp.pad(x1u, ((0, 0),
                        (diffY // 2, diffY - diffY // 2),
                        (diffX // 2, diffX - diffX // 2),
                        (0, 0)))
    x = jnp.concatenate([x2, x1u], axis=-1)

    def conv(a, w):
        return lax.conv_general_dilated(
            a.astype(jnp.bfloat16), w.astype(jnp.bfloat16), (1, 1), 'SAME',
            dimension_numbers=('NHWC', 'HWIO', 'NHWC'),
            preferred_element_type=jnp.float32)

    def inorm_relu(a):
        mean = a.mean(axis=(1, 2), keepdims=True)
        var = ((a - mean) ** 2).mean(axis=(1, 2), keepdims=True)
        return jnp.maximum((a - mean) * lax.rsqrt(var + EPS), 0.0)

    h = inorm_relu(conv(x, w1))
    return inorm_relu(conv(h, w2))


if __name__ == "__main__":
    key = jax.random.PRNGKey(0)
    k1, k2, k3, k4 = jax.random.split(key, 4)

    # up(in_ch=16, out_ch=8): x1 (upsampled path) has 8 ch, x2 (skip) has 8 ch.
    N, C1, C2, OUT_CH = 2, 8, 8, 8
    H1, W1 = 8, 8          # x1 spatial (pre-upsample)
    H2, W2 = 16, 16        # x2 spatial
    IN_CH = C1 + C2        # 16 channels entering double_conv

    x1 = jax.random.normal(k1, (N, H1, W1, C1), jnp.float32)
    x2 = jax.random.normal(k2, (N, H2, W2, C2), jnp.float32)
    w1 = jax.random.normal(k3, (3, 3, IN_CH, OUT_CH), jnp.float32) * 0.1
    w2 = jax.random.normal(k4, (3, 3, OUT_CH, OUT_CH), jnp.float32) * 0.1

    out = jax.block_until_ready(up_forward(x1, x2, w1, w2))
    ref = _ref_forward(x1, x2, w1, w2)

    assert out.shape == (N, H2, W2, OUT_CH), out.shape
    err = float(jnp.max(jnp.abs(out - ref)))
    # bf16 MXU operands (matched in the reference) leave ~1e-3-scale rounding
    # noise from re-rounding the intermediate activation; f32 would match 1e-5.
    assert jnp.allclose(out, ref, atol=1e-2, rtol=1e-2), err
    print("KERNEL_OK")
</pallas_src>

<mosaic_0001>
module attributes {stable_mosaic.version = 11 : i64} {
  func.func @_double_conv_kernel(%arg0: i32, %arg1: memref<2x16x256xbf16, #tpu.memory_space<vmem>>, %arg2: memref<3x256x128xbf16, #tpu.memory_space<vmem>>, %arg3: memref<3x128x128xbf16, #tpu.memory_space<vmem>>, %arg4: memref<2x16x128xf32, #tpu.memory_space<vmem>>, %arg5: memref<36x256xbf16, #tpu.memory_space<vmem>>, %arg6: memref<36x128xbf16, #tpu.memory_space<vmem>>) attributes {dimension_semantics = [#tpu.dimension_semantics<parallel>], iteration_bounds = array<i64: 1>, scalar_prefetch = 0 : i64, scratch_operands = 2 : i64, tpu.core_type = #tpu.core_type<tc>, window_params = [{transform_indices = @transform_0, window_bounds = array<i64: 2, 16, 256>}, {pipeline_mode = #tpu.pipeline_mode<synchronous>, transform_indices = @transform_1, window_bounds = array<i64: 3, 256, 128>}, {pipeline_mode = #tpu.pipeline_mode<synchronous>, transform_indices = @transform_2, window_bounds = array<i64: 3, 128, 128>}, {transform_indices = @transform_3, window_bounds = array<i64: 2, 16, 128>}]} {
    %cst = arith.constant 0.000000e+00 : bf16
    %0 = vector.broadcast %cst : bf16 to vector<1x256xbf16>
    %cst_0 = arith.constant 0.000000e+00 : bf16
    %1 = vector.broadcast %cst_0 : bf16 to vector<1x128xbf16>
    %c0 = arith.constant 0 : index
    %c0_1 = arith.constant 0 : index
    %2 = vector.load %arg5[%c0, %c0_1] : memref<36x256xbf16, #tpu.memory_space<vmem>>, vector<1x256xbf16>
    tpu.vector_store %arg5[%c0, %c0_1], %0 {strides = array<i32>} : memref<36x256xbf16, #tpu.memory_space<vmem>>, vector<1x256xbf16>,
    %c0_2 = arith.constant 0 : index
    %c0_3 = arith.constant 0 : index
    %c0_4 = arith.constant 0 : index
    %3 = vector.load %arg1[%c0_2, %c0_3, %c0_4] : memref<2x16x256xbf16, #tpu.memory_space<vmem>>, vector<1x16x256xbf16>
    %4 = vector.shape_cast %3 : vector<1x16x256xbf16> to vector<16x256xbf16>
    %c1 = arith.constant 1 : index
    %c0_5 = arith.constant 0 : index
    %5 = vector.load %arg5[%c1, %c0_5] : memref<36x256xbf16, #tpu.memory_space<vmem>>, vector<16x256xbf16>
    tpu.vector_store %arg5[%c1, %c0_5], %4 {strides = array<i32>} : memref<36x256xbf16, #tpu.memory_space<vmem>>, vector<16x256xbf16>,
    %c17 = arith.constant 17 : index
    %c0_6 = arith.constant 0 : index
    %6 = vector.load %arg5[%c17, %c0_6] : memref<36x256xbf16, #tpu.memory_space<vmem>>, vector<1x256xbf16>
    tpu.vector_store %arg5[%c17, %c0_6], %0 {strides = array<i32>} : memref<36x256xbf16, #tpu.memory_space<vmem>>, vector<1x256xbf16>,
    %c0_7 = arith.constant 0 : index
    %c0_8 = arith.constant 0 : index
    %7 = vector.load %arg6[%c0_7, %c0_8] : memref<36x128xbf16, #tpu.memory_space<vmem>>, vector<1x128xbf16>
    tpu.vector_store %arg6[%c0_7, %c0_8], %1 {strides = array<i32>} : memref<36x128xbf16, #tpu.memory_space<vmem>>, vector<1x128xbf16>,
    %c17_9 = arith.constant 17 : index
    %c0_10 = arith.constant 0 : index
    %8 = vector.load %arg6[%c17_9, %c0_10] : memref<36x128xbf16, #tpu.memory_space<vmem>>, vector<1x128xbf16>
    tpu.vector_store %arg6[%c17_9, %c0_10], %1 {strides = array<i32>} : memref<36x128xbf16, #tpu.memory_space<vmem>>, vector<1x128xbf16>,
    %c18 = arith.constant 18 : index
    %c0_11 = arith.constant 0 : index
    %9 = vector.load %arg5[%c18, %c0_11] : memref<36x256xbf16, #tpu.memory_space<vmem>>, vector<1x256xbf16>
    tpu.vector_store %arg5[%c18, %c0_11], %0 {strides = array<i32>} : memref<36x256xbf16, #tpu.memory_space<vmem>>, vector<1x256xbf16>,
    %c1_12 = arith.constant 1 : index
    %c0_13 = arith.constant 0 : index
    %c0_14 = arith.constant 0 : index
    %10 = vector.load %arg1[%c1_12, %c0_13, %c0_14] : memref<2x16x256xbf16, #tpu.memory_space<vmem>>, vector<1x16x256xbf16>
    %11 = vector.shape_cast %10 : vector<1x16x256xbf16> to vector<16x256xbf16>
    %c19 = arith.constant 19 : index
    %c0_15 = arith.constant 0 : index
    %12 = vector.load %arg5[%c19, %c0_15] : memref<36x256xbf16, #tpu.memory_space<vmem>>, vector<16x256xbf16>
    tpu.vector_store %arg5[%c19, %c0_15], %11 {strides = array<i32>} : memref<36x256xbf16, #tpu.memory_space<vmem>>, vector<16x256xbf16>,
    %c35 = arith.constant 35 : index
    %c0_16 = arith.constant 0 : index
    %13 = vector.load %arg5[%c35, %c0_16] : memref<36x256xbf16, #tpu.memory_space<vmem>>, vector<1x256xbf16>
    tpu.vector_store %arg5[%c35, %c0_16], %0 {strides = array<i32>} : memref<36x256xbf16, #tpu.memory_space<vmem>>, vector<1x256xbf16>,
    %c18_17 = arith.constant 18 : index
    %c0_18 = arith.constant 0 : index
    %14 = vector.load %arg6[%c18_17, %c0_18] : memref<36x128xbf16, #tpu.memory_space<vmem>>, vector<1x128xbf16>
    tpu.vector_store %arg6[%c18_17, %c0_18], %1 {strides = array<i32>} : memref<36x128xbf16, #tpu.memory_space<vmem>>, vector<1x128xbf16>,
    %c35_19 = arith.constant 35 : index
    %c0_20 = arith.constant 0 : index
    %15 = vector.load %arg6[%c35_19, %c0_20] : memref<36x128xbf16, #tpu.memory_space<vmem>>, vector<1x128xbf16>
    tpu.vector_store %arg6[%c35_19, %c0_20], %1 {strides = array<i32>} : memref<36x128xbf16, #tpu.memory_space<vmem>>, vector<1x128xbf16>,
    %cst_21 = arith.constant 0.000000e+00 : f32
    %16 = vector.broadcast %cst_21 : f32 to vector<34x128xf32>
    %c0_22 = arith.constant 0 : index
    %c0_23 = arith.constant 0 : index
    %17 = vector.load %arg5[%c0_22, %c0_23] : memref<36x256xbf16, #tpu.memory_space<vmem>>, vector<34x256xbf16>
    %c0_24 = arith.constant 0 : index
    %c0_25 = arith.constant 0 : index
    %c0_26 = arith.constant 0 : index
    %18 = vector.load %arg2[%c0_24, %c0_25, %c0_26] : memref<3x256x128xbf16, #tpu.memory_space<vmem>>, vector<1x256x128xbf16>
    %19 = vector.shape_cast %18 : vector<1x256x128xbf16> to vector<256x128xbf16>
    %cst_27 = arith.constant dense<0.000000e+00> : vector<34x128xf32>
    %20 = tpu.matmul %17, %19, %cst_27 {dimension_numbers = #tpu.dot_dimension_numbers<[1], [0], [0], [1], [0, 0, 1, 1], [], []>} : vector<34x256xbf16>, vector<256x128xbf16>, vector<34x128xf32> -> vector<34x128xf32>
    %21 = arith.addf %16, %20 : vector<34x128xf32>
    %c1_28 = arith.constant 1 : index
    %c0_29 = arith.constant 0 : index
    %22 = vector.load %arg5[%c1_28, %c0_29] : memref<36x256xbf16, #tpu.memory_space<vmem>>, vector<34x256xbf16>
    %c1_30 = arith.constant 1 : index
    %c0_31 = arith.constant 0 : index
    %c0_32 = arith.constant 0 : index
    %23 = vector.load %arg2[%c1_30, %c0_31, %c0_32] : memref<3x256x128xbf16, #tpu.memory_space<vmem>>, vector<1x256x128xbf16>
    %24 = vector.shape_cast %23 : vector<1x256x128xbf16> to vector<256x128xbf16>
    %cst_33 = arith.constant dense<0.000000e+00> : vector<34x128xf32>
    %25 = tpu.matmul %22, %24, %cst_33 {dimension_numbers = #tpu.dot_dimension_numbers<[1], [0], [0], [1], [0, 0, 1, 1], [], []>} : vector<34x256xbf16>, vector<256x128xbf16>, vector<34x128xf32> -> vector<34x128xf32>
    %26 = arith.addf %21, %25 : vector<34x128xf32>
    %c2 = arith.constant 2 : index
    %c0_34 = arith.constant 0 : index
    %27 = vector.load %arg5[%c2, %c0_34] : memref<36x256xbf16, #tpu.memory_space<vmem>>, vector<34x256xbf16>
    %c2_35 = arith.constant 2 : index
    %c0_36 = arith.constant 0 : index
    %c0_37 = arith.constant 0 : index
    %28 = vector.load %arg2[%c2_35, %c0_36, %c0_37] : memref<3x256x128xbf16, #tpu.memory_space<vmem>>, vector<1x256x128xbf16>
    %29 = vector.shape_cast %28 : vector<1x256x128xbf16> to vector<256x128xbf16>
    %cst_38 = arith.constant dense<0.000000e+00> : vector<34x128xf32>
    %30 = tpu.matmul %27, %29, %cst_38 {dimension_numbers = #tpu.dot_dimension_numbers<[1], [0], [0], [1], [0, 0, 1, 1], [], []>} : vector<34x256xbf16>, vector<256x128xbf16>, vector<34x128xf32> -> vector<34x128xf32>
    %31 = arith.addf %26, %30 : vector<34x128xf32>
    %32 = vector.extract_strided_slice %31 {offsets = [0, 0], sizes = [16, 128], strides = [1, 1]} : vector<34x128xf32> to vector<16x128xf32>
    %cst_39 = arith.constant dense<0.000000e+00> : vector<128xf32>
    %33 = vector.multi_reduction <add>, %32, %cst_39 [0] : vector<16x128xf32> to vector<128xf32>
    %34 = vector.shape_cast %33 : vector<128xf32> to vector<1x128xf32>
    %35 = arith.mulf %32, %32 : vector<16x128xf32>
    %cst_40 = arith.constant dense<0.000000e+00> : vector<128xf32>
    %36 = vector.multi_reduction <add>, %35, %cst_40 [0] : vector<16x128xf32> to vector<128xf32>
    %37 = vector.shape_cast %36 : vector<128xf32> to vector<1x128xf32>
    %38 = tpu.concatenate %34, %37 in 0 : vector<1x128xf32>, vector<1x128xf32> -> vector<2x128xf32>
    %c8_i32 = arith.constant 8 : i32
    %39 = tpu.dynamic_rotate %38 by %c8_i32 dim 1 : vector<2x128xf32>, i32 -> vector<2x128xf32>
    %40 = arith.addf %38, %39 : vector<2x128xf32>
    %c16_i32 = arith.constant 16 : i32
    %41 = tpu.dynamic_rotate %40 by %c16_i32 dim 1 : vector<2x128xf32>, i32 -> vector<2x128xf32>
    %42 = arith.addf %40, %41 : vector<2x128xf32>
    %c32_i32 = arith.constant 32 : i32
    %43 = tpu.dynamic_rotate %42 by %c32_i32 dim 1 : vector<2x128xf32>, i32 -> vector<2x128xf32>
    %44 = arith.addf %42, %43 : vector<2x128xf32>
    %c64_i32 = arith.constant 64 : i32
    %45 = tpu.dynamic_rotate %44 by %c64_i32 dim 1 : vector<2x128xf32>, i32 -> vector<2x128xf32>
    %46 = arith.addf %44, %45 : vector<2x128xf32>
    %cst_41 = arith.constant 3.906250e-03 : f32
    %47 = vector.broadcast %cst_41 : f32 to vector<2x128xf32>
    %48 = arith.mulf %46, %47 : vector<2x128xf32>
    %49 = vector.extract_strided_slice %48 {offsets = [0, 0], sizes = [1, 128], strides = [1, 1]} : vector<2x128xf32> to vector<1x128xf32>
    %50 = vector.extract_strided_slice %48 {offsets = [1, 0], sizes = [1, 128], strides = [1, 1]} : vector<2x128xf32> to vector<1x128xf32>
    %51 = arith.mulf %49, %49 : vector<1x128xf32>
    %52 = arith.subf %50, %51 : vector<1x128xf32>
    %53 = vector.broadcast %49 : vector<1x128xf32> to vector<16x128xf32>
    %54 = arith.subf %32, %53 : vector<16x128xf32>
    %cst_42 = arith.constant 9.99999974E-6 : f32
    %55 = vector.broadcast %cst_42 : f32 to vector<1x128xf32>
    %56 = arith.addf %52, %55 : vector<1x128xf32>
    %57 = math.rsqrt %56 : vector<1x128xf32>
    %58 = vector.broadcast %57 : vector<1x128xf32> to vector<16x128xf32>
    %59 = arith.mulf %54, %58 : vector<16x128xf32>
    %cst_43 = arith.constant 0.000000e+00 : f32
    %60 = vector.broadcast %cst_43 : f32 to vector<16x128xf32>
    %61 = arith.maximumf %59, %60 : vector<16x128xf32>
    %62 = arith.truncf %61 : vector<16x128xf32> to vector<16x128xbf16>
    %c1_44 = arith.constant 1 : index
    %c0_45 = arith.constant 0 : index
    %63 = vector.load %arg6[%c1_44, %c0_45] : memref<36x128xbf16, #tpu.memory_space<vmem>>, vector<16x128xbf16>
    tpu.vector_store %arg6[%c1_44, %c0_45], %62 {strides = array<i32>} : memref<36x128xbf16, #tpu.memory_space<vmem>>, vector<16x128xbf16>,
    %64 = vector.extract_strided_slice %31 {offsets = [18, 0], sizes = [16, 128], strides = [1, 1]} : vector<34x128xf32> to vector<16x128xf32>
    %cst_46 = arith.constant dense<0.000000e+00> : vector<128xf32>
    %65 = vector.multi_reduction <add>, %64, %cst_46 [0] : vector<16x128xf32> to vector<128xf32>
    %66 = vector.shape_cast %65 : vector<128xf32> to vector<1x128xf32>
    %67 = arith.mulf %64, %64 : vector<16x128xf32>
    %cst_47 = arith.constant dense<0.000000e+00> : vector<128xf32>
    %68 = vector.multi_reduction <add>, %67, %cst_47 [0] : vector<16x128xf32> to vector<128xf32>
    %69 = vector.shape_cast %68 : vector<128xf32> to vector<1x128xf32>
    %70 = tpu.concatenate %66, %69 in 0 : vector<1x128xf32>, vector<1x128xf32> -> vector<2x128xf32>
    %c8_i32_48 = arith.constant 8 : i32
    %71 = tpu.dynamic_rotate %70 by %c8_i32_48 dim 1 : vector<2x128xf32>, i32 -> vector<2x128xf32>
    %72 = arith.addf %70, %71 : vector<2x128xf32>
    %c16_i32_49 = arith.constant 16 : i32
    %73 = tpu.dynamic_rotate %72 by %c16_i32_49 dim 1 : vector<2x128xf32>, i32 -> vector<2x128xf32>
    %74 = arith.addf %72, %73 : vector<2x128xf32>
    %c32_i32_50 = arith.constant 32 : i32
    %75 = tpu.dynamic_rotate %74 by %c32_i32_50 dim 1 : vector<2x128xf32>, i32 -> vector<2x128xf32>
    %76 = arith.addf %74, %75 : vector<2x128xf32>
    %c64_i32_51 = arith.constant 64 : i32
    %77 = tpu.dynamic_rotate %76 by %c64_i32_51 dim 1 : vector<2x128xf32>, i32 -> vector<2x128xf32>
    %78 = arith.addf %76, %77 : vector<2x128xf32>
    %cst_52 = arith.constant 3.906250e-03 : f32
    %79 = vector.broadcast %cst_52 : f32 to vector<2x128xf32>
    %80 = arith.mulf %78, %79 : vector<2x128xf32>
    %81 = vector.extract_strided_slice %80 {offsets = [0, 0], sizes = [1, 128], strides = [1, 1]} : vector<2x128xf32> to vector<1x128xf32>
    %82 = vector.extract_strided_slice %80 {offsets = [1, 0], sizes = [1, 128], strides = [1, 1]} : vector<2x128xf32> to vector<1x128xf32>
    %83 = arith.mulf %81, %81 : vector<1x128xf32>
    %84 = arith.subf %82, %83 : vector<1x128xf32>
    %85 = vector.broadcast %81 : vector<1x128xf32> to vector<16x128xf32>
    %86 = arith.subf %64, %85 : vector<16x128xf32>
    %cst_53 = arith.constant 9.99999974E-6 : f32
    %87 = vector.broadcast %cst_53 : f32 to vector<1x128xf32>
    %88 = arith.addf %84, %87 : vector<1x128xf32>
    %89 = math.rsqrt %88 : vector<1x128xf32>
    %90 = vector.broadcast %89 : vector<1x128xf32> to vector<16x128xf32>
    %91 = arith.mulf %86, %90 : vector<16x128xf32>
    %cst_54 = arith.constant 0.000000e+00 : f32
    %92 = vector.broadcast %cst_54 : f32 to vector<16x128xf32>
    %93 = arith.maximumf %91, %92 : vector<16x128xf32>
    %94 = arith.truncf %93 : vector<16x128xf32> to vector<16x128xbf16>
    %c19_55 = arith.constant 19 : index
    %c0_56 = arith.constant 0 : index
    %95 = vector.load %arg6[%c19_55, %c0_56] : memref<36x128xbf16, #tpu.memory_space<vmem>>, vector<16x128xbf16>
    tpu.vector_store %arg6[%c19_55, %c0_56], %94 {strides = array<i32>} : memref<36x128xbf16, #tpu.memory_space<vmem>>, vector<16x128xbf16>,
    %cst_57 = arith.constant 0.000000e+00 : f32
    %96 = vector.broadcast %cst_57 : f32 to vector<34x128xf32>
    %c0_58 = arith.constant 0 : index
    %c0_59 = arith.constant 0 : index
    %97 = vector.load %arg6[%c0_58, %c0_59] : memref<36x128xbf16, #tpu.memory_space<vmem>>, vector<34x128xbf16>
    %c0_60 = arith.constant 0 : index
    %c0_61 = arith.constant 0 : index
    %c0_62 = arith.constant 0 : index
    %98 = vector.load %arg3[%c0_60, %c0_61, %c0_62] : memref<3x128x128xbf16, #tpu.memory_space<vmem>>, vector<1x128x128xbf16>
    %99 = vector.shape_cast %98 : vector<1x128x128xbf16> to vector<128x128xbf16>
    %cst_63 = arith.constant dense<0.000000e+00> : vector<34x128xf32>
    %100 = tpu.matmul %97, %99, %cst_63 {dimension_numbers = #tpu.dot_dimension_numbers<[1], [0], [0], [1], [0, 0, 1, 1], [], []>} : vector<34x128xbf16>, vector<128x128xbf16>, vector<34x128xf32> -> vector<34x128xf32>
    %101 = arith.addf %96, %100 : vector<34x128xf32>
    %c1_64 = arith.constant 1 : index
    %c0_65 = arith.constant 0 : index
    %102 = vector.load %arg6[%c1_64, %c0_65] : memref<36x128xbf16, #tpu.memory_space<vmem>>, vector<34x128xbf16>
    %c1_66 = arith.constant 1 : index
    %c0_67 = arith.constant 0 : index
    %c0_68 = arith.constant 0 : index
    %103 = vector.load %arg3[%c1_66, %c0_67, %c0_68] : memref<3x128x128xbf16, #tpu.memory_space<vmem>>, vector<1x128x128xbf16>
    %104 = vector.shape_cast %103 : vector<1x128x128xbf16> to vector<128x128xbf16>
    %cst_69 = arith.constant dense<0.000000e+00> : vector<34x128xf32>
    %105 = tpu.matmul %102, %104, %cst_69 {dimension_numbers = #tpu.dot_dimension_numbers<[1], [0], [0], [1], [0, 0, 1, 1], [], []>} : vector<34x128xbf16>, vector<128x128xbf16>, vector<34x128xf32> -> vector<34x128xf32>
    %106 = arith.addf %101, %105 : vector<34x128xf32>
    %c2_70 = arith.constant 2 : index
    %c0_71 = arith.constant 0 : index
    %107 = vector.load %arg6[%c2_70, %c0_71] : memref<36x128xbf16, #tpu.memory_space<vmem>>, vector<34x128xbf16>
    %c2_72 = arith.constant 2 : index
    %c0_73 = arith.constant 0 : index
    %c0_74 = arith.constant 0 : index
    %108 = vector.load %arg3[%c2_72, %c0_73, %c0_74] : memref<3x128x128xbf16, #tpu.memory_space<vmem>>, vector<1x128x128xbf16>
    %109 = vector.shape_cast %108 : vector<1x128x128xbf16> to vector<128x128xbf16>
    %cst_75 = arith.constant dense<0.000000e+00> : vector<34x128xf32>
    %110 = tpu.matmul %107, %109, %cst_75 {dimension_numbers = #tpu.dot_dimension_numbers<[1], [0], [0], [1], [0, 0, 1, 1], [], []>} : vector<34x128xbf16>, vector<128x128xbf16>, vector<34x128xf32> -> vector<34x128xf32>
    %111 = arith.addf %106, %110 : vector<34x128xf32>
    %112 = vector.extract_strided_slice %111 {offsets = [0, 0], sizes = [16, 128], strides = [1, 1]} : vector<34x128xf32> to vector<16x128xf32>
    %cst_76 = arith.constant dense<0.000000e+00> : vector<128xf32>
    %113 = vector.multi_reduction <add>, %112, %cst_76 [0] : vector<16x128xf32> to vector<128xf32>
    %114 = vector.shape_cast %113 : vector<128xf32> to vector<1x128xf32>
    %115 = arith.mulf %112, %112 : vector<16x128xf32>
    %cst_77 = arith.constant dense<0.000000e+00> : vector<128xf32>
    %116 = vector.multi_reduction <add>, %115, %cst_77 [0] : vector<16x128xf32> to vector<128xf32>
    %117 = vector.shape_cast %116 : vector<128xf32> to vector<1x128xf32>
    %118 = tpu.concatenate %114, %117 in 0 : vector<1x128xf32>, vector<1x128xf32> -> vector<2x128xf32>
    %c8_i32_78 = arith.constant 8 : i32
    %119 = tpu.dynamic_rotate %118 by %c8_i32_78 dim 1 : vector<2x128xf32>, i32 -> vector<2x128xf32>
    %120 = arith.addf %118, %119 : vector<2x128xf32>
    %c16_i32_79 = arith.constant 16 : i32
    %121 = tpu.dynamic_rotate %120 by %c16_i32_79 dim 1 : vector<2x128xf32>, i32 -> vector<2x128xf32>
    %122 = arith.addf %120, %121 : vector<2x128xf32>
    %c32_i32_80 = arith.constant 32 : i32
    %123 = tpu.dynamic_rotate %122 by %c32_i32_80 dim 1 : vector<2x128xf32>, i32 -> vector<2x128xf32>
    %124 = arith.addf %122, %123 : vector<2x128xf32>
    %c64_i32_81 = arith.constant 64 : i32
    %125 = tpu.dynamic_rotate %124 by %c64_i32_81 dim 1 : vector<2x128xf32>, i32 -> vector<2x128xf32>
    %126 = arith.addf %124, %125 : vector<2x128xf32>
    %cst_82 = arith.constant 3.906250e-03 : f32
    %127 = vector.broadcast %cst_82 : f32 to vector<2x128xf32>
    %128 = arith.mulf %126, %127 : vector<2x128xf32>
    %129 = vector.extract_strided_slice %128 {offsets = [0, 0], sizes = [1, 128], strides = [1, 1]} : vector<2x128xf32> to vector<1x128xf32>
    %130 = vector.extract_strided_slice %128 {offsets = [1, 0], sizes = [1, 128], strides = [1, 1]} : vector<2x128xf32> to vector<1x128xf32>
    %131 = arith.mulf %129, %129 : vector<1x128xf32>
    %132 = arith.subf %130, %131 : vector<1x128xf32>
    %133 = vector.broadcast %129 : vector<1x128xf32> to vector<16x128xf32>
    %134 = arith.subf %112, %133 : vector<16x128xf32>
    %cst_83 = arith.constant 9.99999974E-6 : f32
    %135 = vector.broadcast %cst_83 : f32 to vector<1x128xf32>
    %136 = arith.addf %132, %135 : vector<1x128xf32>
    %137 = math.rsqrt %136 : vector<1x128xf32>
    %138 = vector.broadcast %137 : vector<1x128xf32> to vector<16x128xf32>
    %139 = arith.mulf %134, %138 : vector<16x128xf32>
    %cst_84 = arith.constant 0.000000e+00 : f32
    %140 = vector.broadcast %cst_84 : f32 to vector<16x128xf32>
    %141 = arith.maximumf %139, %140 : vector<16x128xf32>
    %c0_85 = arith.constant 0 : index
    %c0_86 = arith.constant 0 : index
    %c0_87 = arith.constant 0 : index
    %142 = vector.load %arg4[%c0_85, %c0_86, %c0_87] : memref<2x16x128xf32, #tpu.memory_space<vmem>>, vector<1x16x128xf32>
    %143 = vector.shape_cast %142 : vector<1x16x128xf32> to vector<16x128xf32>
    %144 = vector.shape_cast %141 : vector<16x128xf32> to vector<1x16x128xf32>
    tpu.vector_store %arg4[%c0_85, %c0_86, %c0_87], %144 {strides = array<i32>} : memref<2x16x128xf32, #tpu.memory_space<vmem>>, vector<1x16x128xf32>,
    %145 = vector.extract_strided_slice %111 {offsets = [18, 0], sizes = [16, 128], strides = [1, 1]} : vector<34x128xf32> to vector<16x128xf32>
    %cst_88 = arith.constant dense<0.000000e+00> : vector<128xf32>
    %146 = vector.multi_reduction <add>, %145, %cst_88 [0] : vector<16x128xf32> to vector<128xf32>
    %147 = vector.shape_cast %146 : vector<128xf32> to vector<1x128xf32>
    %148 = arith.mulf %145, %145 : vector<16x128xf32>
    %cst_89 = arith.constant dense<0.000000e+00> : vector<128xf32>
    %149 = vector.multi_reduction <add>, %148, %cst_89 [0] : vector<16x128xf32> to vector<128xf32>
    %150 = vector.shape_cast %149 : vector<128xf32> to vector<1x128xf32>
    %151 = tpu.concatenate %147, %150 in 0 : vector<1x128xf32>, vector<1x128xf32> -> vector<2x128xf32>
    %c8_i32_90 = arith.constant 8 : i32
    %152 = tpu.dynamic_rotate %151 by %c8_i32_90 dim 1 : vector<2x128xf32>, i32 -> vector<2x128xf32>
    %153 = arith.addf %151, %152 : vector<2x128xf32>
    %c16_i32_91 = arith.constant 16 : i32
    %154 = tpu.dynamic_rotate %153 by %c16_i32_91 dim 1 : vector<2x128xf32>, i32 -> vector<2x128xf32>
    %155 = arith.addf %153, %154 : vector<2x128xf32>
    %c32_i32_92 = arith.constant 32 : i32
    %156 = tpu.dynamic_rotate %155 by %c32_i32_92 dim 1 : vector<2x128xf32>, i32 -> vector<2x128xf32>
    %157 = arith.addf %155, %156 : vector<2x128xf32>
    %c64_i32_93 = arith.constant 64 : i32
    %158 = tpu.dynamic_rotate %157 by %c64_i32_93 dim 1 : vector<2x128xf32>, i32 -> vector<2x128xf32>
    %159 = arith.addf %157, %158 : vector<2x128xf32>
    %cst_94 = arith.constant 3.906250e-03 : f32
    %160 = vector.broadcast %cst_94 : f32 to vector<2x128xf32>
    %161 = arith.mulf %159, %160 : vector<2x128xf32>
    %162 = vector.extract_strided_slice %161 {offsets = [0, 0], sizes = [1, 128], strides = [1, 1]} : vector<2x128xf32> to vector<1x128xf32>
    %163 = vector.extract_strided_slice %161 {offsets = [1, 0], sizes = [1, 128], strides = [1, 1]} : vector<2x128xf32> to vector<1x128xf32>
    %164 = arith.mulf %162, %162 : vector<1x128xf32>
    %165 = arith.subf %163, %164 : vector<1x128xf32>
    %166 = vector.broadcast %162 : vector<1x128xf32> to vector<16x128xf32>
    %167 = arith.subf %145, %166 : vector<16x128xf32>
    %cst_95 = arith.constant 9.99999974E-6 : f32
    %168 = vector.broadcast %cst_95 : f32 to vector<1x128xf32>
    %169 = arith.addf %165, %168 : vector<1x128xf32>
    %170 = math.rsqrt %169 : vector<1x128xf32>
    %171 = vector.broadcast %170 : vector<1x128xf32> to vector<16x128xf32>
    %172 = arith.mulf %167, %171 : vector<16x128xf32>
    %cst_96 = arith.constant 0.000000e+00 : f32
    %173 = vector.broadcast %cst_96 : f32 to vector<16x128xf32>
    %174 = arith.maximumf %172, %173 : vector<16x128xf32>
    %c1_97 = arith.constant 1 : index
    %c0_98 = arith.constant 0 : index
    %c0_99 = arith.constant 0 : index
    %175 = vector.load %arg4[%c1_97, %c0_98, %c0_99] : memref<2x16x128xf32, #tpu.memory_space<vmem>>, vector<1x16x128xf32>
    %176 = vector.shape_cast %175 : vector<1x16x128xf32> to vector<16x128xf32>
    %177 = vector.shape_cast %174 : vector<16x128xf32> to vector<1x16x128xf32>
    tpu.vector_store %arg4[%c1_97, %c0_98, %c0_99], %177 {strides = array<i32>} : memref<2x16x128xf32, #tpu.memory_space<vmem>>, vector<1x16x128xf32>,
    return
  }
  func.func @transform_0(%arg0: i32) -> (i32, i32, i32) {
    %c0_i32 = arith.constant 0 : i32
    %c0_i32_0 = arith.constant 0 : i32
    %c0_i32_1 = arith.constant 0 : i32
    return %arg0, %c0_i32, %c0_i32_0 : i32, i32, i32
  }
  func.func @transform_1(%arg0: i32) -> (i32, i32, i32) {
    %c0_i32 = arith.constant 0 : i32
    %c0_i32_0 = arith.constant 0 : i32
    %c0_i32_1 = arith.constant 0 : i32
    %c0_i32_2 = arith.constant 0 : i32
    return %c0_i32, %c0_i32_0, %c0_i32_1 : i32, i32, i32
  }
  func.func @transform_2(%arg0: i32) -> (i32, i32, i32) {
    %c0_i32 = arith.constant 0 : i32
    %c0_i32_0 = arith.constant 0 : i32
    %c0_i32_1 = arith.constant 0 : i32
    %c0_i32_2 = arith.constant 0 : i32
    return %c0_i32, %c0_i32_0, %c0_i32_1 : i32, i32, i32
  }
  func.func @transform_3(%arg0: i32) -> (i32, i32, i32) {
    %c0_i32 = arith.constant 0 : i32
    %c0_i32_0 = arith.constant 0 : i32
    %c0_i32_1 = arith.constant 0 : i32
    return %arg0, %c0_i32, %c0_i32_0 : i32, i32, i32
  }
}

</mosaic_0001>

<llo_original>
// kernel: tpu_custom_call.1
$region0: #{tpu_custom_call.1}
  #allocation0 [shape = 'u32[]', space=smem, size = 0x4, offset = 0x4, fixed_abs, tag = 'smem constant byte address 0x4 - core index']
  #allocation1 [shape = 'u32[144,128]{1,0:T(1,128)}', space=vmem, size = 0x12000, scoped, tag = 'internal scratch']
  #allocation2 [shape = 'bf16[36,256]{1,0:T(8,128)(2,1)}', space=vmem, size = 0x5000, scoped, tag = 'scratch operand']
  #allocation3 [shape = 'bf16[36,128]{1,0:T(8,128)(2,1)}', space=vmem, size = 0x2800, scoped, tag = 'scratch operand']
  %s0 = inlined_call_operand.hbm [shape: bf16[2,16,256], index: 0, kind: input, shape index: {}]
  %s1 = inlined_call_operand.hbm [shape: bf16[3,256,128], index: 1, kind: input, shape index: {}]
  %s2 = inlined_call_operand.hbm [shape: bf16[3,128,128], index: 2, kind: input, shape index: {}]
  %s3 = inlined_call_operand.hbm [shape: f32[2,16,128], index: 3, kind: output, shape index: {}]
  %s4 = sld [smem:[#allocation0]]
  $region34: #{tpu_custom_call.1} parent=0
    _
  %s6 = ssub.s32 1, %s4
  %s7 = scalar_select 0, %s6, %s4
  $region1: #{tpu_custom_call.1} parent=0
    #allocation4 [shape = 'u8[16384]{0}', space=vmem, size = 0x4000, scoped, tag = 'input window, operand 0, single buffered']
    #allocation5 [shape = 's32[1]{0}', space=sflag, size = 0x4, scoped, tag = 'scoped memory for tpu_custom_call.1']
    #allocation6 [shape = 's32[1]{0}', space=sflag, size = 0x4, scoped, tag = 'scoped memory for tpu_custom_call.1']
    #allocation7 [shape = 'u8[196608]{0}', space=vmem, size = 0x30000, scoped, tag = 'input window, operand 1, single buffered']
    #allocation8 [shape = 's32[1]{0}', space=sflag, size = 0x4, scoped, tag = 'scoped memory for tpu_custom_call.1']
    #allocation9 [shape = 'u8[98304]{0}', space=vmem, size = 0x18000, scoped, tag = 'input window, operand 2, single buffered']
    #allocation10 [shape = 'u8[16384]{0}', space=vmem, size = 0x4000, scoped, tag = 'output window, operand 0, single buffered']
    %8 = vsyncpa [#allocation5], 0
    %9 = vsyncpa [#allocation8], 0
    %10 = vsyncpa [#allocation6], 0
    // Predicated region
    $region2: #{tpu_custom_call.1} parent=1 // pred_check
      _
    $region3: #{tpu_custom_call.1} parent=1 // pred_check_branch
      %12 = sbr.rel (0) target = $region5
    $region4: #{tpu_custom_call.1} parent=1 // pred_region
      %s14 = ssub.s32 512, 512
      %15 = vsyncadd [#allocation5], %s14
      %s16 = sshll.u32 [#allocation4], 4
      %s17 = int_to_ptr.vmem [resolvable:$true] %s16
      %22 = dma.hbm_to_vmem [thread:$0]  %s0, 512, %s17, [#allocation5], 128, 128, 8
    $region5: #{tpu_custom_call.1} parent=1 // pred_fallthru
      _
    // Predicated region
    $region6: #{tpu_custom_call.1} parent=1 // pred_check
      _
    $region7: #{tpu_custom_call.1} parent=1 // pred_check_branch
      %24 = sbr.rel (0) target = $region9
    $region8: #{tpu_custom_call.1} parent=1 // pred_region
      %s26 = ssub.s32 6144, 6144
      %27 = vsyncadd [#allocation8], %s26
      %s28 = sshll.u32 [#allocation7], 4
      %s29 = int_to_ptr.vmem [resolvable:$true] %s28
      %34 = dma.hbm_to_vmem [thread:$0]  %s1, 6144, %s29, [#allocation8], 64, 64, 4
    $region9: #{tpu_custom_call.1} parent=1 // pred_fallthru
      _
    // Predicated region
    $region10: #{tpu_custom_call.1} parent=1 // pred_check
      _
    $region11: #{tpu_custom_call.1} parent=1 // pred_check_branch
      %36 = sbr.rel (0) target = $region13
    $region12: #{tpu_custom_call.1} parent=1 // pred_region
      %s38 = ssub.s32 3072, 3072
      %39 = vsyncadd [#allocation8], %s38
      %s40 = sshll.u32 [#allocation9], 4
      %s41 = int_to_ptr.vmem [resolvable:$true] %s40
      %46 = dma.hbm_to_vmem [thread:$0]  %s2, 3072, %s41, [#allocation8], 64, 64, 4
    $region13: #{tpu_custom_call.1} parent=1 // pred_fallthru
      _
    // Predicated region
    $region14: #{tpu_custom_call.1} parent=1 // pred_check
      _
    $region15: #{tpu_custom_call.1} parent=1 // pred_check_branch
      %48 = sbr.rel (0) target = $region17
    $region16: #{tpu_custom_call.1} parent=1 // pred_region
      %49 = dma.done [#allocation5], 512
    $region17: #{tpu_custom_call.1} parent=1 // pred_fallthru
      _
    // Predicated region
    $region18: #{tpu_custom_call.1} parent=1 // pred_check
      _
    $region19: #{tpu_custom_call.1} parent=1 // pred_check_branch
      %51 = sbr.rel (0) target = $region21
    $region20: #{tpu_custom_call.1} parent=1 // pred_region
      %52 = dma.done [#allocation8], 6144
    $region21: #{tpu_custom_call.1} parent=1 // pred_fallthru
      _
    // Predicated region
    $region22: #{tpu_custom_call.1} parent=1 // pred_check
      _
    $region23: #{tpu_custom_call.1} parent=1 // pred_check_branch
      %54 = sbr.rel (0) target = $region25
    $region24: #{tpu_custom_call.1} parent=1 // pred_region
      %55 = dma.done [#allocation8], 3072
    $region25: #{tpu_custom_call.1} parent=1 // pred_fallthru
      _
    %vm57 = vcmask 1040384
    %vm58 = vsmask.f32 256
    %vm59 = vmand %vm57, %vm58
    %vm60 = vcmask 1044484
    %vm61 = vsmask.f32 4352
    %vm62 = vmand %vm60, %vm61
    %vm63 = vmor %vm62, %vm59
    %v64 = vld [vmem:[#allocation2] sm:$0x11]
    %v65 = vsel %vm63, 0, %v64
    %66 = vst [vmem:[#allocation2] sm:$0x11] %v65
    %v67 = vld [vmem:[#allocation4] sm:$0xff]
    %v68 = vld [vmem:[#allocation4 + $0x8] sm:$0xff]
    %vm69 = vsmask.f32 4368
    %vm70 = vmor %vm58, %vm69
    %v72 = vshrl.u32 %v67, 16
    %v74 = vrot.slane %v72, 7
    %v75 = vshll.u32 %v67, 16
    %v77 = vor.u32 %v74, %v75
    %v78 = vrot.slane %v74, 4
    %v80 = vshrl.u32 %v68, 16
    %v82 = vrot.slane %v80, 7
    %v83 = vshll.u32 %v68, 16
    %v85 = vor.u32 %v82, %v83
    %v86 = vsel %vm70, %v78, %v85
    %v87 = vrot.slane %v82, 4
    %vm91 = vcmask 1043456
    %vm92 = vsmask.f32 7938
    %vm93 = vmand %vm91, %vm92
    %vm94 = vcmask 1047556
    %vm95 = vsmask.f32 7954
    %vm96 = vmand %vm94, %vm95
    %vm97 = vmor %vm96, %vm93
    %v98 = vld [vmem:[#allocation2] sm:$0xff]
    %v99 = vsel %vm97, %v77, %v98
    %100 = vst [vmem:[#allocation2] sm:$0xff] %v99
    %101 = vst [vmem:[#allocation2 + $0x8] sm:$0xff] %v86
    %v102 = vld [vmem:[#allocation2 + $0x10] sm:$0x11]
    %v103 = vsel %vm63, %v87, %v102
    %104 = vst [vmem:[#allocation2 + $0x10] sm:$0x11] %v103
    %vm105 = vmand %vm57, %vm92
    %vm106 = vmand %vm60, %vm95
    %vm107 = vmor %vm106, %vm105
    %v108 = vld [vmem:[#allocation2 + $0x10] sm:$0x11]
    %v109 = vsel %vm107, 0, %v108
    %110 = vst [vmem:[#allocation2 + $0x10] sm:$0x11] %v109
    %v111 = vld [vmem:[#allocation3] sm:$0x1]
    %v112 = vsel %vm59, 0, %v111
    %113 = vst [vmem:[#allocation3] sm:$0x1] %v112
    %v114 = vld [vmem:[#allocation3 + $0x8] sm:$0x1]
    %v115 = vsel %vm105, 0, %v114
    %116 = vst [vmem:[#allocation3 + $0x8] sm:$0x1] %v115
    %vm117 = vcmask 1041409
    %vm118 = vsmask.f32 1280
    %vm119 = vmand %vm117, %vm118
    %vm120 = vcmask 1045509
    %vm121 = vsmask.f32 5376
    %vm122 = vmand %vm120, %vm121
    %vm123 = vmor %vm122, %vm119
    %v124 = vld [vmem:[#allocation2 + $0x10] sm:$0x22]
    %v125 = vsel %vm123, 0, %v124
    %126 = vst [vmem:[#allocation2 + $0x10] sm:$0x22] %v125
    %s127 = scalar_lea.vmem [#allocation4], 16
    %v128 = vld [vmem:[%s127] sm:$0xff]
    %v129 = vld [vmem:[%s127 + $0x8] sm:$0xff]
    %vm130 = vsmask.f32 5392
    %vm131 = vmor %vm118, %vm130
    %v133 = vshrl.u32 %v128, 16
    %v135 = vrot.slane %v133, 6
    %v136 = vshll.u32 %v128, 16
    %v138 = vrot.slane %v136, 7
    %v139 = vor.u32 %v135, %v138
    %v140 = vrot.slane %v139, 4
    %v142 = vshrl.u32 %v129, 16
    %v144 = vrot.slane %v142, 6
    %v145 = vshll.u32 %v129, 16
    %v147 = vrot.slane %v145, 7
    %v148 = vor.u32 %v144, %v147
    %v149 = vsel %vm131, %v140, %v148
    %v150 = vrot.slane %v148, 4
    %vm154 = vcmask 1043457
    %vm155 = vsmask.f32 7942
    %vm156 = vmand %vm154, %vm155
    %vm157 = vcmask 1047557
    %vm158 = vsmask.f32 7958
    %vm159 = vmand %vm157, %vm158
    %vm160 = vmor %vm159, %vm156
    %v161 = vld [vmem:[#allocation2 + $0x10] sm:$0xee]
    %v162 = vsel %vm160, %v139, %v161
    %163 = vst [vmem:[#allocation2 + $0x10] sm:$0xee] %v162
    %164 = vst [vmem:[#allocation2 + $0x18] sm:$0xff] %v149
    %vm165 = vcmask 1041408
    %vm166 = vmand %vm165, %vm118
    %vm167 = vcmask 1045508
    %vm168 = vmand %vm167, %vm121
    %vm169 = vmor %vm168, %vm166
    %v170 = vld [vmem:[#allocation2 + $0x20] sm:$0x33]
    %v171 = vsel %vm169, %v150, %v170
    %172 = vst [vmem:[#allocation2 + $0x20] sm:$0x33] %v171
    %vm173 = vmand %vm117, %vm155
    %vm174 = vmand %vm120, %vm158
    %vm175 = vmor %vm174, %vm173
    %v176 = vld [vmem:[#allocation2 + $0x20] sm:$0x22]
    %v177 = vsel %vm175, 0, %v176
    %178 = vst [vmem:[#allocation2 + $0x20] sm:$0x22] %v177
    %v179 = vld [vmem:[#allocation3 + $0x8] sm:$0x2]
    %v180 = vsel %vm119, 0, %v179
    %181 = vst [vmem:[#allocation3 + $0x8] sm:$0x2] %v180
    %v182 = vld [vmem:[#allocation3 + $0x10] sm:$0x2]
    %v183 = vsel %vm173, 0, %v182
    %184 = vst [vmem:[#allocation3 + $0x10] sm:$0x2] %v183
    %v185 = vld [vmem:[#allocation2] sm:$0xff]
    %v186 = vld [vmem:[#allocation2 + $0x8] sm:$0xff]
    %v187 = vld [vmem:[#allocation2 + $0x10] sm:$0xff]
    %v188 = vld [vmem:[#allocation2 + $0x18] sm:$0xff]
    %v189 = vld [vmem:[#allocation2 + $0x20] sm:$0x11]
    %v190 = vld [vmem:[#allocation7] sm:$0xf]
    %v191 = vld [vmem:[#allocation7 + $0x4] sm:$0xf]
    %v192 = vld [vmem:[#allocation7 + $0x8] sm:$0xf]
    %v193 = vld [vmem:[#allocation7 + $0xc] sm:$0xf]
    %v194 = vld [vmem:[#allocation7 + $0x10] sm:$0xf]
    %v195 = vld [vmem:[#allocation7 + $0x14] sm:$0xf]
    %v196 = vld [vmem:[#allocation7 + $0x18] sm:$0xf]
    %v197 = vld [vmem:[#allocation7 + $0x1c] sm:$0xf]
    %v198 = vld [vmem:[#allocation7 + $0x20] sm:$0xf]
    %v199 = vld [vmem:[#allocation7 + $0x24] sm:$0xf]
    %v200 = vld [vmem:[#allocation7 + $0x28] sm:$0xf]
    %v201 = vld [vmem:[#allocation7 + $0x2c] sm:$0xf]
    %v202 = vld [vmem:[#allocation7 + $0x30] sm:$0xf]
    %v203 = vld [vmem:[#allocation7 + $0x34] sm:$0xf]
    %v204 = vld [vmem:[#allocation7 + $0x38] sm:$0xf]
    %v205 = vld [vmem:[#allocation7 + $0x3c] sm:$0xf]
    %v206 = vld [vmem:[#allocation7 + $0x40] sm:$0xf]
    %v207 = vld [vmem:[#allocation7 + $0x44] sm:$0xf]
    %v208 = vld [vmem:[#allocation7 + $0x48] sm:$0xf]
    %v209 = vld [vmem:[#allocation7 + $0x4c] sm:$0xf]
    %v210 = vld [vmem:[#allocation7 + $0x50] sm:$0xf]
    %v211 = vld [vmem:[#allocation7 + $0x54] sm:$0xf]
    %v212 = vld [vmem:[#allocation7 + $0x58] sm:$0xf]
    %v213 = vld [vmem:[#allocation7 + $0x5c] sm:$0xf]
    %v214 = vld [vmem:[#allocation7 + $0x60] sm:$0xf]
    %v215 = vld [vmem:[#allocation7 + $0x64] sm:$0xf]
    %v216 = vld [vmem:[#allocation7 + $0x68] sm:$0xf]
    %v217 = vld [vmem:[#allocation7 + $0x6c] sm:$0xf]
    %v218 = vld [vmem:[#allocation7 + $0x70] sm:$0xf]
    %v219 = vld [vmem:[#allocation7 + $0x74] sm:$0xf]
    %v220 = vld [vmem:[#allocation7 + $0x78] sm:$0xf]
    %v221 = vld [vmem:[#allocation7 + $0x7c] sm:$0xf]
    %v222 = vld [vmem:[#allocation2 + $0x20] sm:$0x33]
    %s223 = scalar_lea.vmem [#allocation7], 128
    %v224 = vld [vmem:[%s223] sm:$0xf]
    %v225 = vld [vmem:[%s223 + $0x4] sm:$0xf]
    %v226 = vld [vmem:[%s223 + $0x8] sm:$0xf]
    %v227 = vld [vmem:[%s223 + $0xc] sm:$0xf]
    %v228 = vld [vmem:[%s223 + $0x10] sm:$0xf]
    %v229 = vld [vmem:[%s223 + $0x14] sm:$0xf]
    %v230 = vld [vmem:[%s223 + $0x18] sm:$0xf]
    %v231 = vld [vmem:[%s223 + $0x1c] sm:$0xf]
    %v232 = vld [vmem:[%s223 + $0x20] sm:$0xf]
    %v233 = vld [vmem:[%s223 + $0x24] sm:$0xf]
    %v234 = vld [vmem:[%s223 + $0x28] sm:$0xf]
    %v235 = vld [vmem:[%s223 + $0x2c] sm:$0xf]
    %v236 = vld [vmem:[%s223 + $0x30] sm:$0xf]
    %v237 = vld [vmem:[%s223 + $0x34] sm:$0xf]
    %v238 = vld [vmem:[%s223 + $0x38] sm:$0xf]
    %v239 = vld [vmem:[%s223 + $0x3c] sm:$0xf]
    %v240 = vld [vmem:[%s223 + $0x40] sm:$0xf]
    %v241 = vld [vmem:[%s223 + $0x44] sm:$0xf]
    %v242 = vld [vmem:[%s223 + $0x48] sm:$0xf]
    %v243 = vld [vmem:[%s223 + $0x4c] sm:$0xf]
    %v244 = vld [vmem:[%s223 + $0x50] sm:$0xf]
    %v245 = vld [vmem:[%s223 + $0x54] sm:$0xf]
    %v246 = vld [vmem:[%s223 + $0x58] sm:$0xf]
    %v247 = vld [vmem:[%s223 + $0x5c] sm:$0xf]
    %v248 = vld [vmem:[%s223 + $0x60] sm:$0xf]
    %v249 = vld [vmem:[%s223 + $0x64] sm:$0xf]
    %v250 = vld [vmem:[%s223 + $0x68] sm:$0xf]
    %v251 = vld [vmem:[%s223 + $0x6c] sm:$0xf]
    %v252 = vld [vmem:[%s223 + $0x70] sm:$0xf]
    %v253 = vld [vmem:[%s223 + $0x74] sm:$0xf]
    %v254 = vld [vmem:[%s223 + $0x78] sm:$0xf]
    %v255 = vld [vmem:[%s223 + $0x7c] sm:$0xf]
    %v261 = vunpack.c.l.b16 %v185
    %v262 = vunpack.c.h.b16 %v185
    %v263 = vunpack.c.l.b16 %v186
    %v264 = vunpack.c.h.b16 %v186
    %v265 = vunpack.c.l.b16 %v187
    %v266 = vunpack.c.h.b16 %v187
    %v267 = vunpack.c.l.b16 %v188
    %v268 = vunpack.c.h.b16 %v188
    %v269 = vunpack.c.l.b16 %v222
    %v270 = vunpack.c.h.b16 %v222
    %v271 = vpack.c.b16 %v263, %v261
    %v272 = vpack.c.b16 %v264, %v262
    %v273 = vpack.c.b16 %v267, %v265
    %v274 = vpack.c.b16 %v268, %v266
    %v275 = vpack.c.b16 %v269, %v269
    %v276 = vpack.c.b16 %v270, %v270
    %vm277 = vsmask.f32 7424
    %v279 = vshrl.u32 %v271, 16
    %v281 = vshll.u32 %v271, 16
    %v283 = vrot.slane %v281, 1
    %v284 = vor.u32 %v279, %v283
    %v286 = vshll.u32 %v273, 16
    %v288 = vrot.slane %v286, 1
    %v289 = vsel %vm277, %v284, %v288
    %v291 = vshrl.u32 %v272, 16
    %v293 = vshll.u32 %v272, 16
    %v295 = vrot.slane %v293, 1
    %v296 = vor.u32 %v291, %v295
    %v298 = vshll.u32 %v274, 16
    %v300 = vrot.slane %v298, 1
    %v301 = vsel %vm277, %v296, %v300
    %v302 = vshrl.u32 %v273, 16
    %v304 = vor.u32 %v302, %v288
    %v306 = vshll.u32 %v275, 16
    %v308 = vrot.slane %v306, 1
    %v309 = vsel %vm277, %v304, %v308
    %v310 = vshrl.u32 %v274, 16
    %v312 = vor.u32 %v310, %v300
    %v314 = vshll.u32 %v276, 16
    %v316 = vrot.slane %v314, 1
    %v317 = vsel %vm277, %v312, %v316
    %v318 = vshrl.u32 %v275, 16
    %v320 = vor.u32 %v318, %v308
    %v321 = vshrl.u32 %v276, 16
    %v323 = vor.u32 %v321, %v316
    %v362 = vunpack.c.l.b16 %v224
    %v363 = vunpack.c.l.b16 %v225
    %v364 = vunpack.c.l.b16 %v226
    %v365 = vunpack.c.l.b16 %v227
    %v366 = vunpack.c.l.b16 %v228
    %v367 = vunpack.c.l.b16 %v229
    %v368 = vunpack.c.l.b16 %v230
    %v369 = vunpack.c.l.b16 %v231
    %v370 = vunpack.c.l.b16 %v232
    %v371 = vunpack.c.l.b16 %v233
    %v372 = vunpack.c.l.b16 %v234
    %v373 = vunpack.c.l.b16 %v235
    %v374 = vunpack.c.l.b16 %v236
    %v375 = vunpack.c.l.b16 %v237
    %v376 = vunpack.c.l.b16 %v238
    %v377 = vunpack.c.l.b16 %v239
    %v378 = vunpack.c.l.b16 %v240
    %v379 = vunpack.c.l.b16 %v241
    %v380 = vunpack.c.l.b16 %v242
    %v381 = vunpack.c.l.b16 %v243
    %v382 = vunpack.c.l.b16 %v244
    %v383 = vunpack.c.l.b16 %v245
    %v384 = vunpack.c.l.b16 %v246
    %v385 = vunpack.c.l.b16 %v247
    %v386 = vunpack.c.l.b16 %v248
    %v387 = vunpack.c.l.b16 %v249
    %v388 = vunpack.c.l.b16 %v250
    %v389 = vunpack.c.l.b16 %v251
    %v390 = vunpack.c.l.b16 %v252
    %v391 = vunpack.c.l.b16 %v253
    %v392 = vunpack.c.l.b16 %v254
    %v393 = vunpack.c.l.b16 %v255
    %v394 = vpack.c.b16 %v363, %v362
    %v395 = vpack.c.b16 %v365, %v364
    %v396 = vpack.c.b16 %v367, %v366
    %v397 = vpack.c.b16 %v369, %v368
    %v398 = vpack.c.b16 %v371, %v370
    %v399 = vpack.c.b16 %v373, %v372
    %v400 = vpack.c.b16 %v375, %v374
    %v401 = vpack.c.b16 %v377, %v376
    %v402 = vpack.c.b16 %v379, %v378
    %v403 = vpack.c.b16 %v381, %v380
    %v404 = vpack.c.b16 %v383, %v382
    %v405 = vpack.c.b16 %v385, %v384
    %v406 = vpack.c.b16 %v387, %v386
    %v407 = vpack.c.b16 %v389, %v388
    %v408 = vpack.c.b16 %v391, %v390
    %v409 = vpack.c.b16 %v393, %v392
    %426 = vmatprep.subr.bf16.mxu0 0
    %427 = vmatpush1.bf16.msra.mxu0 %v394
    %428 = vmatprep.subr.bf16.mxu0 0
    %429 = vmatpush1.bf16.msra.mxu0 %v395
    %430 = vmatprep.subr.bf16.mxu0 0
    %431 = vmatpush1.bf16.msra.mxu0 %v396
    %432 = vmatprep.subr.bf16.mxu0 0
    %433 = vmatpush1.bf16.msra.mxu0 %v397
    %434 = vmatprep.subr.bf16.mxu0 0
    %435 = vmatpush1.bf16.msra.mxu0 %v398
    %436 = vmatprep.subr.bf16.mxu0 0
    %437 = vmatpush1.bf16.msra.mxu0 %v399
    %438 = vmatprep.subr.bf16.mxu0 0
    %439 = vmatpush1.bf16.msra.mxu0 %v400
    %440 = vmatprep.subr.bf16.mxu0 0
    %441 = vmatpush1.bf16.msra.mxu0 %v401
    %442 = vmatprep.subr.bf16.mxu0 0
    %443 = vmatpush1.bf16.msra.mxu0 %v402
    %444 = vmatprep.subr.bf16.mxu0 0
    %445 = vmatpush1.bf16.msra.mxu0 %v403
    %446 = vmatprep.subr.bf16.mxu0 0
    %447 = vmatpush1.bf16.msra.mxu0 %v404
    %448 = vmatprep.subr.bf16.mxu0 0
    %449 = vmatpush1.bf16.msra.mxu0 %v405
    %450 = vmatprep.subr.bf16.mxu0 0
    %451 = vmatpush1.bf16.msra.mxu0 %v406
    %452 = vmatprep.subr.bf16.mxu0 0
    %453 = vmatpush1.bf16.msra.mxu0 %v407
    %454 = vmatprep.subr.bf16.mxu0 0
    %455 = vmatpush1.bf16.msra.mxu0 %v408
    %456 = vmatprep.subr.bf16.mxu0 0
    %457 = vmatpush1.bf16.msra.mxu0 %v409
    %458 = vmatprep.mubr.bf16.mxu0 %v301
    %459 = vmatmul.mubr.bf16.gmra.mrb[0].mxu0 %v289
    %v460 = vpop.f32.mrb[0].mxu0
    %v461 = vadd.f32 0.0, %v460
    %v462 = vpop.f32.mrb[0].mxu0
    %v463 = vpop.f32.mrb[0].mxu0
    %v464 = vadd.f32 0.0, %v463
    %v465 = vpop.f32.mrb[0].mxu0
    %466 = vmatprep.mubr.bf16.mxu0 %v317
    %467 = vmatmul.mubr.bf16.gmra.mrb[0].mxu0 %v309
    %v468 = vpop.f32.mrb[0].mxu0
    %v469 = vadd.f32 0.0, %v468
    %v470 = vpop.f32.mrb[0].mxu0
    %v471 = vpop.f32.mrb[0].mxu0
    %v472 = vadd.f32 0.0, %v471
    %v473 = vpop.f32.mrb[0].mxu0
    %474 = vmatprep.mubr.bf16.mxu0 %v323
    %475 = vmatmul.mubr.bf16.gmra.mrb[0].mxu0 %v320
    %v476 = vpop.f32.mrb[0].mxu0
    %v477 = vadd.f32 0.0, %v476
    %v478 = vpop.f32.mrb[0].mxu0
    %v479 = vpop.f32.mrb[0].mxu0
    %v480 = vpop.f32.mrb[0].mxu0
    %481 = vdwg.mxu0
    %v483 = vunpack.c.l.b16 %v189
    %v484 = vunpack.c.h.b16 %v189
    %v485 = vpack.c.b16 %v483, %v483
    %v486 = vpack.c.b16 %v484, %v484
    %v525 = vunpack.c.l.b16 %v190
    %v526 = vunpack.c.l.b16 %v191
    %v527 = vunpack.c.l.b16 %v192
    %v528 = vunpack.c.l.b16 %v193
    %v529 = vunpack.c.l.b16 %v194
    %v530 = vunpack.c.l.b16 %v195
    %v531 = vunpack.c.l.b16 %v196
    %v532 = vunpack.c.l.b16 %v197
    %v533 = vunpack.c.l.b16 %v198
    %v534 = vunpack.c.l.b16 %v199
    %v535 = vunpack.c.l.b16 %v200
    %v536 = vunpack.c.l.b16 %v201
    %v537 = vunpack.c.l.b16 %v202
    %v538 = vunpack.c.l.b16 %v203
    %v539 = vunpack.c.l.b16 %v204
    %v540 = vunpack.c.l.b16 %v205
    %v541 = vunpack.c.l.b16 %v206
    %v542 = vunpack.c.l.b16 %v207
    %v543 = vunpack.c.l.b16 %v208
    %v544 = vunpack.c.l.b16 %v209
    %v545 = vunpack.c.l.b16 %v210
    %v546 = vunpack.c.l.b16 %v211
    %v547 = vunpack.c.l.b16 %v212
    %v548 = vunpack.c.l.b16 %v213
    %v549 = vunpack.c.l.b16 %v214
    %v550 = vunpack.c.l.b16 %v215
    %v551 = vunpack.c.l.b16 %v216
    %v552 = vunpack.c.l.b16 %v217
    %v553 = vunpack.c.l.b16 %v218
    %v554 = vunpack.c.l.b16 %v219
    %v555 = vunpack.c.l.b16 %v220
    %v556 = vunpack.c.l.b16 %v221
    %v557 = vpack.c.b16 %v526, %v525
    %v558 = vpack.c.b16 %v528, %v527
    %v559 = vpack.c.b16 %v530, %v529
    %v560 = vpack.c.b16 %v532, %v531
    %v561 = vpack.c.b16 %v534, %v533
    %v562 = vpack.c.b16 %v536, %v535
    %v563 = vpack.c.b16 %v538, %v537
    %v564 = vpack.c.b16 %v540, %v539
    %v565 = vpack.c.b16 %v542, %v541
    %v566 = vpack.c.b16 %v544, %v543
    %v567 = vpack.c.b16 %v546, %v545
    %v568 = vpack.c.b16 %v548, %v547
    %v569 = vpack.c.b16 %v550, %v549
    %v570 = vpack.c.b16 %v552, %v551
    %v571 = vpack.c.b16 %v554, %v553
    %v572 = vpack.c.b16 %v556, %v555
    %589 = vmatprep.subr.bf16.mxu0 0
    %590 = vmatpush1.bf16.msra.mxu0 %v557
    %591 = vmatprep.subr.bf16.mxu0 0
    %592 = vmatpush1.bf16.msra.mxu0 %v558
    %593 = vmatprep.subr.bf16.mxu0 0
    %594 = vmatpush1.bf16.msra.mxu0 %v559
    %595 = vmatprep.subr.bf16.mxu0 0
    %596 = vmatpush1.bf16.msra.mxu0 %v560
    %597 = vmatprep.subr.bf16.mxu0 0
    %598 = vmatpush1.bf16.msra.mxu0 %v561
    %599 = vmatprep.subr.bf16.mxu0 0
    %600 = vmatpush1.bf16.msra.mxu0 %v562
    %601 = vmatprep.subr.bf16.mxu0 0
    %602 = vmatpush1.bf16.msra.mxu0 %v563
    %603 = vmatprep.subr.bf16.mxu0 0
    %604 = vmatpush1.bf16.msra.mxu0 %v564
    %605 = vmatprep.subr.bf16.mxu0 0
    %606 = vmatpush1.bf16.msra.mxu0 %v565
    %607 = vmatprep.subr.bf16.mxu0 0
    %608 = vmatpush1.bf16.msra.mxu0 %v566
    %609 = vmatprep.subr.bf16.mxu0 0
    %610 = vmatpush1.bf16.msra.mxu0 %v567
    %611 = vmatprep.subr.bf16.mxu0 0
    %612 = vmatpush1.bf16.msra.mxu0 %v568
    %613 = vmatprep.subr.bf16.mxu0 0
    %614 = vmatpush1.bf16.msra.mxu0 %v569
    %615 = vmatprep.subr.bf16.mxu0 0
    %616 = vmatpush1.bf16.msra.mxu0 %v570
    %617 = vmatprep.subr.bf16.mxu0 0
    %618 = vmatpush1.bf16.msra.mxu0 %v571
    %619 = vmatprep.subr.bf16.mxu0 0
    %620 = vmatpush1.bf16.msra.mxu0 %v572
    %621 = vmatprep.mubr.bf16.mxu0 %v272
    %622 = vmatmul.mubr.bf16.gmra.mrb[0].mxu0 %v271
    %v623 = vpop.f32.mrb[0].mxu0
    %v624 = vadd.f32 %v461, %v623
    %v625 = vpop.f32.mrb[0].mxu0
    %v626 = vpop.f32.mrb[0].mxu0
    %v627 = vadd.f32 %v464, %v626
    %v628 = vpop.f32.mrb[0].mxu0
    %629 = vmatprep.mubr.bf16.mxu0 %v274
    %630 = vmatmul.mubr.bf16.gmra.mrb[0].mxu0 %v273
    %v631 = vpop.f32.mrb[0].mxu0
    %v632 = vadd.f32 %v469, %v631
    %v633 = vpop.f32.mrb[0].mxu0
    %v634 = vpop.f32.mrb[0].mxu0
    %v635 = vadd.f32 %v472, %v634
    %v636 = vpop.f32.mrb[0].mxu0
    %637 = vmatprep.mubr.bf16.mxu0 %v486
    %638 = vmatmul.mubr.bf16.gmra.mrb[0].mxu0 %v485
    %v639 = vpop.f32.mrb[0].mxu0
    %v640 = vadd.f32 %v477, %v639
    %v641 = vpop.f32.mrb[0].mxu0
    %v642 = vpop.f32.mrb[0].mxu0
    %v643 = vpop.f32.mrb[0].mxu0
    %644 = vdwg.mxu0
    %v645 = vld [vmem:[#allocation2] sm:$0xee]
    %s646 = scalar_lea.vmem [#allocation7], 256
    %v647 = vld [vmem:[%s646] sm:$0xf]
    %v648 = vld [vmem:[%s646 + $0x4] sm:$0xf]
    %v649 = vld [vmem:[%s646 + $0x8] sm:$0xf]
    %v650 = vld [vmem:[%s646 + $0xc] sm:$0xf]
    %v651 = vld [vmem:[%s646 + $0x10] sm:$0xf]
    %v652 = vld [vmem:[%s646 + $0x14] sm:$0xf]
    %v653 = vld [vmem:[%s646 + $0x18] sm:$0xf]
    %v654 = vld [vmem:[%s646 + $0x1c] sm:$0xf]
    %v655 = vld [vmem:[%s646 + $0x20] sm:$0xf]
    %v656 = vld [vmem:[%s646 + $0x24] sm:$0xf]
    %v657 = vld [vmem:[%s646 + $0x28] sm:$0xf]
    %v658 = vld [vmem:[%s646 + $0x2c] sm:$0xf]
    %v659 = vld [vmem:[%s646 + $0x30] sm:$0xf]
    %v660 = vld [vmem:[%s646 + $0x34] sm:$0xf]
    %v661 = vld [vmem:[%s646 + $0x38] sm:$0xf]
    %v662 = vld [vmem:[%s646 + $0x3c] sm:$0xf]
    %v663 = vld [vmem:[%s646 + $0x40] sm:$0xf]
    %v664 = vld [vmem:[%s646 + $0x44] sm:$0xf]
    %v665 = vld [vmem:[%s646 + $0x48] sm:$0xf]
    %v666 = vld [vmem:[%s646 + $0x4c] sm:$0xf]
    %v667 = vld [vmem:[%s646 + $0x50] sm:$0xf]
    %v668 = vld [vmem:[%s646 + $0x54] sm:$0xf]
    %v669 = vld [vmem:[%s646 + $0x58] sm:$0xf]
    %v670 = vld [vmem:[%s646 + $0x5c] sm:$0xf]
    %v671 = vld [vmem:[%s646 + $0x60] sm:$0xf]
    %v672 = vld [vmem:[%s646 + $0x64] sm:$0xf]
    %v673 = vld [vmem:[%s646 + $0x68] sm:$0xf]
    %v674 = vld [vmem:[%s646 + $0x6c] sm:$0xf]
    %v675 = vld [vmem:[%s646 + $0x70] sm:$0xf]
    %v676 = vld [vmem:[%s646 + $0x74] sm:$0xf]
    %v677 = vld [vmem:[%s646 + $0x78] sm:$0xf]
    %v678 = vld [vmem:[%s646 + $0x7c] sm:$0xf]
    %v680 = vunpack.c.l.b16 %v645
    %v681 = vunpack.c.h.b16 %v645
    %v682 = vpack.c.b16 %v263, %v680
    %v683 = vpack.c.b16 %v264, %v681
    %vm684 = vcmask 1046528
    %v685 = vrot.slane %v682, 1
    %v686 = vrot.slane %v273, 1
    %v687 = vsel %vm684, %v685, %v686
    %v688 = vrot.slane %v683, 1
    %v689 = vrot.slane %v274, 1
    %v690 = vsel %vm684, %v688, %v689
    %v691 = vrot.slane %v275, 1
    %v692 = vsel %vm684, %v686, %v691
    %v693 = vrot.slane %v276, 1
    %v694 = vsel %vm684, %v689, %v693
    %v733 = vunpack.c.l.b16 %v647
    %v734 = vunpack.c.l.b16 %v648
    %v735 = vunpack.c.l.b16 %v649
    %v736 = vunpack.c.l.b16 %v650
    %v737 = vunpack.c.l.b16 %v651
    %v738 = vunpack.c.l.b16 %v652
    %v739 = vunpack.c.l.b16 %v653
    %v740 = vunpack.c.l.b16 %v654
    %v741 = vunpack.c.l.b16 %v655
    %v742 = vunpack.c.l.b16 %v656
    %v743 = vunpack.c.l.b16 %v657
    %v744 = vunpack.c.l.b16 %v658
    %v745 = vunpack.c.l.b16 %v659
    %v746 = vunpack.c.l.b16 %v660
    %v747 = vunpack.c.l.b16 %v661
    %v748 = vunpack.c.l.b16 %v662
    %v749 = vunpack.c.l.b16 %v663
    %v750 = vunpack.c.l.b16 %v664
    %v751 = vunpack.c.l.b16 %v665
    %v752 = vunpack.c.l.b16 %v666
    %v753 = vunpack.c.l.b16 %v667
    %v754 = vunpack.c.l.b16 %v668
    %v755 = vunpack.c.l.b16 %v669
    %v756 = vunpack.c.l.b16 %v670
    %v757 = vunpack.c.l.b16 %v671
    %v758 = vunpack.c.l.b16 %v672
    %v759 = vunpack.c.l.b16 %v673
    %v760 = vunpack.c.l.b16 %v674
    %v761 = vunpack.c.l.b16 %v675
    %v762 = vunpack.c.l.b16 %v676
    %v763 = vunpack.c.l.b16 %v677
    %v764 = vunpack.c.l.b16 %v678
    %v765 = vpack.c.b16 %v734, %v733
    %v766 = vpack.c.b16 %v736, %v735
    %v767 = vpack.c.b16 %v738, %v737
    %v768 = vpack.c.b16 %v740, %v739
    %v769 = vpack.c.b16 %v742, %v741
    %v770 = vpack.c.b16 %v744, %v743
    %v771 = vpack.c.b16 %v746, %v745
    %v772 = vpack.c.b16 %v748, %v747
    %v773 = vpack.c.b16 %v750, %v749
    %v774 = vpack.c.b16 %v752, %v751
    %v775 = vpack.c.b16 %v754, %v753
    %v776 = vpack.c.b16 %v756, %v755
    %v777 = vpack.c.b16 %v758, %v757
    %v778 = vpack.c.b16 %v760, %v759
    %v779 = vpack.c.b16 %v762, %v761
    %v780 = vpack.c.b16 %v764, %v763
    %797 = vmatprep.subr.bf16.mxu0 0
    %798 = vmatpush1.bf16.msra.mxu0 %v765
    %799 = vmatprep.subr.bf16.mxu0 0
    %800 = vmatpush1.bf16.msra.mxu0 %v766
    %801 = vmatprep.subr.bf16.mxu0 0
    %802 = vmatpush1.bf16.msra.mxu0 %v767
    %803 = vmatprep.subr.bf16.mxu0 0
    %804 = vmatpush1.bf16.msra.mxu0 %v768
    %805 = vmatprep.subr.bf16.mxu0 0
    %806 = vmatpush1.bf16.msra.mxu0 %v769
    %807 = vmatprep.subr.bf16.mxu0 0
    %808 = vmatpush1.bf16.msra.mxu0 %v770
    %809 = vmatprep.subr.bf16.mxu0 0
    %810 = vmatpush1.bf16.msra.mxu0 %v771
    %811 = vmatprep.subr.bf16.mxu0 0
    %812 = vmatpush1.bf16.msra.mxu0 %v772
    %813 = vmatprep.subr.bf16.mxu0 0
    %814 = vmatpush1.bf16.msra.mxu0 %v773
    %815 = vmatprep.subr.bf16.mxu0 0
    %816 = vmatpush1.bf16.msra.mxu0 %v774
    %817 = vmatprep.subr.bf16.mxu0 0
    %818 = vmatpush1.bf16.msra.mxu0 %v775
    %819 = vmatprep.subr.bf16.mxu0 0
    %820 = vmatpush1.bf16.msra.mxu0 %v776
    %821 = vmatprep.subr.bf16.mxu0 0
    %822 = vmatpush1.bf16.msra.mxu0 %v777
    %823 = vmatprep.subr.bf16.mxu0 0
    %824 = vmatpush1.bf16.msra.mxu0 %v778
    %825 = vmatprep.subr.bf16.mxu0 0
    %826 = vmatpush1.bf16.msra.mxu0 %v779
    %827 = vmatprep.subr.bf16.mxu0 0
    %828 = vmatpush1.bf16.msra.mxu0 %v780
    %829 = vmatprep.mubr.bf16.mxu0 %v690
    %830 = vmatmul.mubr.bf16.gmra.mrb[0].mxu0 %v687
    %v831 = vpop.f32.mrb[0].mxu0
    %v832 = vadd.f32 0.0, %v831
    %v833 = vpop.f32.mrb[0].mxu0
    %v834 = vpop.f32.mrb[0].mxu0
    %v835 = vadd.f32 0.0, %v834
    %v836 = vpop.f32.mrb[0].mxu0
    %837 = vmatprep.mubr.bf16.mxu0 %v694
    %838 = vmatmul.mubr.bf16.gmra.mrb[0].mxu0 %v692
    %v839 = vpop.f32.mrb[0].mxu0
    %v840 = vadd.f32 0.0, %v839
    %v841 = vpop.f32.mrb[0].mxu0
    %v842 = vpop.f32.mrb[0].mxu0
    %v843 = vadd.f32 0.0, %v842
    %v844 = vpop.f32.mrb[0].mxu0
    %845 = vmatprep.mubr.bf16.mxu0 %v693
    %846 = vmatmul.mubr.bf16.gmra.mrb[0].mxu0 %v691
    %v847 = vpop.f32.mrb[0].mxu0
    %v848 = vadd.f32 0.0, %v847
    %v849 = vpop.f32.mrb[0].mxu0
    %v850 = vpop.f32.mrb[0].mxu0
    %v851 = vpop.f32.mrb[0].mxu0
    %852 = vdwg.mxu0
    %v853 = vadd.f32 %v624, %v832
    %v854 = vadd.f32 %v627, %v835
    %v855 = vadd.f32 %v632, %v840
    %v856 = vadd.f32 %v635, %v843
    %v857 = vadd.f32 %v640, %v848
    %v858 = vadd.f32 %v853, %v854
    %v859 = vrot.slane %v858, 4
    %v860 = vadd.f32 %v858, %v859
    %v861 = vrot.slane %v860, 2
    %v862 = vadd.f32 %v860, %v861
    %v863 = vrot.slane %v862, 1
    %v864 = vadd.f32 %v862, %v863
    %v865 = vmul.f32 %v853, %v853
    %v866 = vmul.f32 %v854, %v854
    %v867 = vadd.f32 %v865, %v866
    %v868 = vrot.slane %v867, 4
    %v869 = vadd.f32 %v867, %v868
    %v870 = vrot.slane %v869, 2
    %v871 = vadd.f32 %v869, %v870
    %v872 = vrot.slane %v871, 1
    %v873 = vadd.f32 %v871, %v872
    %vm874 = vcmask 1040384
    %v875 = vsel %vm874, %v864, %v873
    %876 = vrot.lane.b32.xlu0 %v875, 8
    %v877 = vpop.permute.xlu0 %876
    %v878 = vadd.f32 %v875, %v877
    %879 = vrot.lane.b32.xlu0 %v878, 16
    %v880 = vpop.permute.xlu0 %879
    %v881 = vadd.f32 %v878, %v880
    %882 = vrot.lane.b32.xlu0 %v881, 32
    %v883 = vpop.permute.xlu0 %882
    %v884 = vadd.f32 %v881, %v883
    %885 = vrot.lane.b32.xlu0 %v884, 64
    %v886 = vpop.permute.xlu0 %885
    %v887 = vadd.f32 %v884, %v886
    %v888 = vmul.f32 %v887, 0.00390625
    %v889 = vmul.f32 %v888, %v888
    %v891 = vrot.slane %v889, 7
    %v893 = vsub.f32 %v888, %v891
    %v894 = vlaneseq
    %v895 = vshrl.u32 %v894, 7
    %v896 = vsub.s32 0, %v895
    %v897 = vrot.slane %v888, %v896
    %v898 = vsub.f32 %v853, %v897
    %v899 = vsub.f32 %v854, %v897
    %v900 = vadd.f32 %v893, 1e-05
    %v901 = vrsqrt.pop %v900
    %v902 = vlaneseq
    %v903 = vshrl.u32 %v902, 7
    %v904 = vsub.s32 1, %v903
    %v905 = vrot.slane %v901, %v904
    %v906 = vmul.f32 %v898, %v905
    %v907 = vmul.f32 %v899, %v905
    %v908 = vmax.f32 %v906, 0.0
    %v909 = vmax.f32 %v907, 0.0
    %v910 = vpack.c.bf16 %v909, %v908
    %v912 = vunpack.c.l.b16 %v910
    %v913 = vunpack.c.h.b16 %v910
    %v914 = vpack.c.b16 %v912, %v912
    %v915 = vpack.c.b16 %v913, %v913
    %v917 = vshrl.u32 %v914, 16
    %v919 = vrot.slane %v917, 7
    %v920 = vshll.u32 %v914, 16
    %v922 = vor.u32 %v919, %v920
    %v923 = vrot.slane %v919, 4
    %v925 = vshrl.u32 %v915, 16
    %v927 = vrot.slane %v925, 7
    %v928 = vshll.u32 %v915, 16
    %v930 = vor.u32 %v927, %v928
    %v931 = vsel %vm70, %v923, %v930
    %v932 = vrot.slane %v927, 4
    %v936 = vld [vmem:[#allocation3] sm:$0xf]
    %v937 = vsel %vm93, %v922, %v936
    %938 = vst [vmem:[#allocation3] sm:$0xf] %v937
    %939 = vst [vmem:[#allocation3 + $0x4] sm:$0xf] %v931
    %v940 = vld [vmem:[#allocation3 + $0x8] sm:$0x1]
    %v941 = vsel %vm59, %v932, %v940
    %942 = vst [vmem:[#allocation3 + $0x8] sm:$0x1] %v941
    %vm946 = vcmask 1045504
    %v947 = vrot.slane %v855, 2
    %v948 = vrot.slane %v856, 2
    %v949 = vsel %vm946, %v947, %v948
    %v950 = vrot.slane %v857, 2
    %v951 = vsel %vm946, %v948, %v950
    %v954 = vadd.f32 %v949, %v951
    %v955 = vrot.slane %v954, 4
    %v956 = vadd.f32 %v954, %v955
    %v957 = vrot.slane %v956, 2
    %v958 = vadd.f32 %v956, %v957
    %v959 = vrot.slane %v958, 1
    %v960 = vadd.f32 %v958, %v959
    %v961 = vmul.f32 %v855, %v855
    %v962 = vmul.f32 %v856, %v856
    %v963 = vmul.f32 %v857, %v857
    %v967 = vrot.slane %v961, 2
    %v968 = vrot.slane %v962, 2
    %v969 = vsel %vm946, %v967, %v968
    %v970 = vrot.slane %v963, 2
    %v971 = vsel %vm946, %v968, %v970
    %v974 = vadd.f32 %v969, %v971
    %v975 = vrot.slane %v974, 4
    %v976 = vadd.f32 %v974, %v975
    %v977 = vrot.slane %v976, 2
    %v978 = vadd.f32 %v976, %v977
    %v979 = vrot.slane %v978, 1
    %v980 = vadd.f32 %v978, %v979
    %v981 = vsel %vm874, %v960, %v980
    %982 = vrot.lane.b32.xlu0 %v981, 8
    %v983 = vpop.permute.xlu0 %982
    %v984 = vadd.f32 %v981, %v983
    %985 = vrot.lane.b32.xlu0 %v984, 16
    %v986 = vpop.permute.xlu0 %985
    %v987 = vadd.f32 %v984, %v986
    %988 = vrot.lane.b32.xlu0 %v987, 32
    %v989 = vpop.permute.xlu0 %988
    %v990 = vadd.f32 %v987, %v989
    %991 = vrot.lane.b32.xlu0 %v990, 64
    %v992 = vpop.permute.xlu0 %991
    %v993 = vadd.f32 %v990, %v992
    %v994 = vmul.f32 %v993, 0.00390625
    %v995 = vmul.f32 %v994, %v994
    %v997 = vrot.slane %v995, 7
    %v999 = vsub.f32 %v994, %v997
    %v1000 = vlaneseq
    %v1001 = vshrl.u32 %v1000, 7
    %v1002 = vsub.s32 0, %v1001
    %v1003 = vrot.slane %v994, %v1002
    %v1004 = vsub.f32 %v855, %v1003
    %v1005 = vsub.f32 %v856, %v1003
    %v1006 = vsub.f32 %v857, %v1003
    %v1007 = vadd.f32 %v999, 1e-05
    %v1008 = vrsqrt.pop %v1007
    %v1009 = vlaneseq
    %v1010 = vshrl.u32 %v1009, 7
    %v1011 = vsub.s32 1, %v1010
    %v1012 = vrot.slane %v1008, %v1011
    %v1013 = vmul.f32 %v1004, %v1012
    %v1014 = vmul.f32 %v1005, %v1012
    %v1015 = vmul.f32 %v1006, %v1012
    %v1016 = vmax.f32 %v1013, 0.0
    %v1017 = vmax.f32 %v1014, 0.0
    %v1018 = vmax.f32 %v1015, 0.0
    %v1019 = vpack.c.bf16 %v1017, %v1016
    %v1020 = vpack.c.bf16 %v1018, %v1018
    %v1023 = vunpack.c.l.b16 %v1019
    %v1024 = vunpack.c.h.b16 %v1019
    %v1025 = vunpack.c.l.b16 %v1020
    %v1026 = vpack.c.b16 %v1023, %v1023
    %v1027 = vpack.c.b16 %v1024, %v1024
    %v1028 = vpack.c.b16 %v1025, %v1025
    %v1030 = vshrl.u32 %v1026, 16
    %v1032 = vrot.slane %v1030, 7
    %v1033 = vshll.u32 %v1026, 16
    %v1035 = vor.u32 %v1032, %v1033
    %v1036 = vrot.slane %v1032, 4
    %v1038 = vshrl.u32 %v1027, 16
    %v1040 = vrot.slane %v1038, 7
    %v1041 = vshll.u32 %v1027, 16
    %v1043 = vor.u32 %v1040, %v1041
    %v1044 = vsel %vm70, %v1036, %v1043
    %v1045 = vrot.slane %v1040, 4
    %v1047 = vshrl.u32 %v1028, 16
    %v1049 = vrot.slane %v1047, 7
    %v1050 = vshll.u32 %v1028, 16
    %v1052 = vor.u32 %v1049, %v1050
    %v1053 = vsel %vm70, %v1045, %v1052
    %v1057 = vld [vmem:[#allocation3 + $0x8] sm:$0xe]
    %v1058 = vsel %vm156, %v1035, %v1057
    %1059 = vst [vmem:[#allocation3 + $0x8] sm:$0xe] %v1058
    %1060 = vst [vmem:[#allocation3 + $0xc] sm:$0xf] %v1044
    %v1061 = vld [vmem:[#allocation3 + $0x10] sm:$0x3]
    %v1062 = vsel %vm166, %v1053, %v1061
    %1063 = vst [vmem:[#allocation3 + $0x10] sm:$0x3] %v1062
    %v1064 = vld [vmem:[#allocation3] sm:$0xf]
    %v1065 = vld [vmem:[#allocation3 + $0x4] sm:$0xf]
    %v1066 = vld [vmem:[#allocation3 + $0x8] sm:$0xf]
    %v1067 = vld [vmem:[#allocation3 + $0xc] sm:$0xf]
    %v1068 = vld [vmem:[#allocation3 + $0x10] sm:$0x1]
    %v1069 = vld [vmem:[#allocation9] sm:$0xf]
    %v1070 = vld [vmem:[#allocation9 + $0x4] sm:$0xf]
    %v1071 = vld [vmem:[#allocation9 + $0x8] sm:$0xf]
    %v1072 = vld [vmem:[#allocation9 + $0xc] sm:$0xf]
    %v1073 = vld [vmem:[#allocation9 + $0x10] sm:$0xf]
    %v1074 = vld [vmem:[#allocation9 + $0x14] sm:$0xf]
    %v1075 = vld [vmem:[#allocation9 + $0x18] sm:$0xf]
    %v1076 = vld [vmem:[#allocation9 + $0x1c] sm:$0xf]
    %v1077 = vld [vmem:[#allocation9 + $0x20] sm:$0xf]
    %v1078 = vld [vmem:[#allocation9 + $0x24] sm:$0xf]
    %v1079 = vld [vmem:[#allocation9 + $0x28] sm:$0xf]
    %v1080 = vld [vmem:[#allocation9 + $0x2c] sm:$0xf]
    %v1081 = vld [vmem:[#allocation9 + $0x30] sm:$0xf]
    %v1082 = vld [vmem:[#allocation9 + $0x34] sm:$0xf]
    %v1083 = vld [vmem:[#allocation9 + $0x38] sm:$0xf]
    %v1084 = vld [vmem:[#allocation9 + $0x3c] sm:$0xf]
    %v1085 = vld [vmem:[#allocation3 + $0x10] sm:$0x3]
    %s1086 = scalar_lea.vmem [#allocation9], 64
    %v1087 = vld [vmem:[%s1086] sm:$0xf]
    %v1088 = vld [vmem:[%s1086 + $0x4] sm:$0xf]
    %v1089 = vld [vmem:[%s1086 + $0x8] sm:$0xf]
    %v1090 = vld [vmem:[%s1086 + $0xc] sm:$0xf]
    %v1091 = vld [vmem:[%s1086 + $0x10] sm:$0xf]
    %v1092 = vld [vmem:[%s1086 + $0x14] sm:$0xf]
    %v1093 = vld [vmem:[%s1086 + $0x18] sm:$0xf]
    %v1094 = vld [vmem:[%s1086 + $0x1c] sm:$0xf]
    %v1095 = vld [vmem:[%s1086 + $0x20] sm:$0xf]
    %v1096 = vld [vmem:[%s1086 + $0x24] sm:$0xf]
    %v1097 = vld [vmem:[%s1086 + $0x28] sm:$0xf]
    %v1098 = vld [vmem:[%s1086 + $0x2c] sm:$0xf]
    %v1099 = vld [vmem:[%s1086 + $0x30] sm:$0xf]
    %v1100 = vld [vmem:[%s1086 + $0x34] sm:$0xf]
    %v1101 = vld [vmem:[%s1086 + $0x38] sm:$0xf]
    %v1102 = vld [vmem:[%s1086 + $0x3c] sm:$0xf]
    %v1108 = vunpack.c.l.b16 %v1064
    %v1109 = vunpack.c.l.b16 %v1065
    %v1110 = vunpack.c.l.b16 %v1066
    %v1111 = vunpack.c.l.b16 %v1067
    %v1112 = vunpack.c.l.b16 %v1085
    %v1113 = vpack.c.b16 %v1109, %v1108
    %v1114 = vpack.c.b16 %v1111, %v1110
    %v1115 = vpack.c.b16 %v1112, %v1112
    %v1117 = vshrl.u32 %v1113, 16
    %v1119 = vshll.u32 %v1113, 16
    %v1121 = vrot.slane %v1119, 1
    %v1122 = vor.u32 %v1117, %v1121
    %v1124 = vshll.u32 %v1114, 16
    %v1126 = vrot.slane %v1124, 1
    %v1127 = vsel %vm277, %v1122, %v1126
    %v1128 = vshrl.u32 %v1114, 16
    %v1130 = vor.u32 %v1128, %v1126
    %v1132 = vshll.u32 %v1115, 16
    %v1134 = vrot.slane %v1132, 1
    %v1135 = vsel %vm277, %v1130, %v1134
    %v1136 = vshrl.u32 %v1115, 16
    %v1138 = vor.u32 %v1136, %v1134
    %v1158 = vunpack.c.l.b16 %v1087
    %v1159 = vunpack.c.l.b16 %v1088
    %v1160 = vunpack.c.l.b16 %v1089
    %v1161 = vunpack.c.l.b16 %v1090
    %v1162 = vunpack.c.l.b16 %v1091
    %v1163 = vunpack.c.l.b16 %v1092
    %v1164 = vunpack.c.l.b16 %v1093
    %v1165 = vunpack.c.l.b16 %v1094
    %v1166 = vunpack.c.l.b16 %v1095
    %v1167 = vunpack.c.l.b16 %v1096
    %v1168 = vunpack.c.l.b16 %v1097
    %v1169 = vunpack.c.l.b16 %v1098
    %v1170 = vunpack.c.l.b16 %v1099
    %v1171 = vunpack.c.l.b16 %v1100
    %v1172 = vunpack.c.l.b16 %v1101
    %v1173 = vunpack.c.l.b16 %v1102
    %v1174 = vpack.c.b16 %v1159, %v1158
    %v1175 = vpack.c.b16 %v1161, %v1160
    %v1176 = vpack.c.b16 %v1163, %v1162
    %v1177 = vpack.c.b16 %v1165, %v1164
    %v1178 = vpack.c.b16 %v1167, %v1166
    %v1179 = vpack.c.b16 %v1169, %v1168
    %v1180 = vpack.c.b16 %v1171, %v1170
    %v1181 = vpack.c.b16 %v1173, %v1172
    %1190 = vmatprep.subr.bf16.mxu0 0
    %1191 = vmatpush1.bf16.msra.mxu0 %v1174
    %1192 = vmatprep.subr.bf16.mxu0 0
    %1193 = vmatpush1.bf16.msra.mxu0 %v1175
    %1194 = vmatprep.subr.bf16.mxu0 0
    %1195 = vmatpush1.bf16.msra.mxu0 %v1176
    %1196 = vmatprep.subr.bf16.mxu0 0
    %1197 = vmatpush1.bf16.msra.mxu0 %v1177
    %1198 = vmatprep.subr.bf16.mxu0 0
    %1199 = vmatpush1.bf16.msra.mxu0 %v1178
    %1200 = vmatprep.subr.bf16.mxu0 0
    %1201 = vmatpush1.bf16.msra.mxu0 %v1179
    %1202 = vmatprep.subr.bf16.mxu0 0
    %1203 = vmatpush1.bf16.msra.mxu0 %v1180
    %1204 = vmatprep.subr.bf16.mxu0 0
    %1205 = vmatpush1.bf16.msra.mxu0 %v1181
    %1206 = vmatprep.subr.bf16.mxu0 0
    %1207 = vmatpush1.bf16.msra.mxu0 0
    %1208 = vmatprep.subr.bf16.mxu0 0
    %1209 = vmatpush1.bf16.msra.mxu0 0
    %1210 = vmatprep.subr.bf16.mxu0 0
    %1211 = vmatpush1.bf16.msra.mxu0 0
    %1212 = vmatprep.subr.bf16.mxu0 0
    %1213 = vmatpush1.bf16.msra.mxu0 0
    %1214 = vmatprep.subr.bf16.mxu0 0
    %1215 = vmatpush1.bf16.msra.mxu0 0
    %1216 = vmatprep.subr.bf16.mxu0 0
    %1217 = vmatpush1.bf16.msra.mxu0 0
    %1218 = vmatprep.subr.bf16.mxu0 0
    %1219 = vmatpush1.bf16.msra.mxu0 0
    %1220 = vmatprep.subr.bf16.mxu0 0
    %1221 = vmatpush1.bf16.msra.mxu0 0
    %1222 = vmatprep.mubr.bf16.mxu0 0
    %1223 = vmatmul.mubr.bf16.gmra.mrb[0].mxu0 %v1127
    %v1224 = vpop.f32.mrb[0].mxu0
    %v1225 = vadd.f32 0.0, %v1224
    %v1226 = vpop.f32.mrb[0].mxu0
    %v1227 = vpop.f32.mrb[0].mxu0
    %v1228 = vadd.f32 0.0, %v1227
    %v1229 = vpop.f32.mrb[0].mxu0
    %1230 = vmatprep.mubr.bf16.mxu0 0
    %1231 = vmatmul.mubr.bf16.gmra.mrb[0].mxu0 %v1135
    %v1232 = vpop.f32.mrb[0].mxu0
    %v1233 = vadd.f32 0.0, %v1232
    %v1234 = vpop.f32.mrb[0].mxu0
    %v1235 = vpop.f32.mrb[0].mxu0
    %v1236 = vadd.f32 0.0, %v1235
    %v1237 = vpop.f32.mrb[0].mxu0
    %1238 = vmatprep.mubr.bf16.mxu0 0
    %1239 = vmatmul.mubr.bf16.gmra.mrb[0].mxu0 %v1138
    %v1240 = vpop.f32.mrb[0].mxu0
    %v1241 = vadd.f32 0.0, %v1240
    %v1242 = vpop.f32.mrb[0].mxu0
    %v1243 = vpop.f32.mrb[0].mxu0
    %v1244 = vpop.f32.mrb[0].mxu0
    %1245 = vdwg.mxu0
    %v1247 = vunpack.c.l.b16 %v1068
    %v1248 = vpack.c.b16 %v1247, %v1247
    %v1268 = vunpack.c.l.b16 %v1069
    %v1269 = vunpack.c.l.b16 %v1070
    %v1270 = vunpack.c.l.b16 %v1071
    %v1271 = vunpack.c.l.b16 %v1072
    %v1272 = vunpack.c.l.b16 %v1073
    %v1273 = vunpack.c.l.b16 %v1074
    %v1274 = vunpack.c.l.b16 %v1075
    %v1275 = vunpack.c.l.b16 %v1076
    %v1276 = vunpack.c.l.b16 %v1077
    %v1277 = vunpack.c.l.b16 %v1078
    %v1278 = vunpack.c.l.b16 %v1079
    %v1279 = vunpack.c.l.b16 %v1080
    %v1280 = vunpack.c.l.b16 %v1081
    %v1281 = vunpack.c.l.b16 %v1082
    %v1282 = vunpack.c.l.b16 %v1083
    %v1283 = vunpack.c.l.b16 %v1084
    %v1284 = vpack.c.b16 %v1269, %v1268
    %v1285 = vpack.c.b16 %v1271, %v1270
    %v1286 = vpack.c.b16 %v1273, %v1272
    %v1287 = vpack.c.b16 %v1275, %v1274
    %v1288 = vpack.c.b16 %v1277, %v1276
    %v1289 = vpack.c.b16 %v1279, %v1278
    %v1290 = vpack.c.b16 %v1281, %v1280
    %v1291 = vpack.c.b16 %v1283, %v1282
    %1300 = vmatprep.subr.bf16.mxu0 0
    %1301 = vmatpush1.bf16.msra.mxu0 %v1284
    %1302 = vmatprep.subr.bf16.mxu0 0
    %1303 = vmatpush1.bf16.msra.mxu0 %v1285
    %1304 = vmatprep.subr.bf16.mxu0 0
    %1305 = vmatpush1.bf16.msra.mxu0 %v1286
    %1306 = vmatprep.subr.bf16.mxu0 0
    %1307 = vmatpush1.bf16.msra.mxu0 %v1287
    %1308 = vmatprep.subr.bf16.mxu0 0
    %1309 = vmatpush1.bf16.msra.mxu0 %v1288
    %1310 = vmatprep.subr.bf16.mxu0 0
    %1311 = vmatpush1.bf16.msra.mxu0 %v1289
    %1312 = vmatprep.subr.bf16.mxu0 0
    %1313 = vmatpush1.bf16.msra.mxu0 %v1290
    %1314 = vmatprep.subr.bf16.mxu0 0
    %1315 = vmatpush1.bf16.msra.mxu0 %v1291
    %1316 = vmatprep.subr.bf16.mxu0 0
    %1317 = vmatpush1.bf16.msra.mxu0 0
    %1318 = vmatprep.subr.bf16.mxu0 0
    %1319 = vmatpush1.bf16.msra.mxu0 0
    %1320 = vmatprep.subr.bf16.mxu0 0
    %1321 = vmatpush1.bf16.msra.mxu0 0
    %1322 = vmatprep.subr.bf16.mxu0 0
    %1323 = vmatpush1.bf16.msra.mxu0 0
    %1324 = vmatprep.subr.bf16.mxu0 0
    %1325 = vmatpush1.bf16.msra.mxu0 0
    %1326 = vmatprep.subr.bf16.mxu0 0
    %1327 = vmatpush1.bf16.msra.mxu0 0
    %1328 = vmatprep.subr.bf16.mxu0 0
    %1329 = vmatpush1.bf16.msra.mxu0 0
    %1330 = vmatprep.subr.bf16.mxu0 0
    %1331 = vmatpush1.bf16.msra.mxu0 0
    %1332 = vmatprep.mubr.bf16.mxu0 0
    %1333 = vmatmul.mubr.bf16.gmra.mrb[0].mxu0 %v1113
    %v1334 = vpop.f32.mrb[0].mxu0
    %v1335 = vadd.f32 %v1225, %v1334
    %v1336 = vpop.f32.mrb[0].mxu0
    %v1337 = vpop.f32.mrb[0].mxu0
    %v1338 = vadd.f32 %v1228, %v1337
    %v1339 = vpop.f32.mrb[0].mxu0
    %1340 = vmatprep.mubr.bf16.mxu0 0
    %1341 = vmatmul.mubr.bf16.gmra.mrb[0].mxu0 %v1114
    %v1342 = vpop.f32.mrb[0].mxu0
    %v1343 = vadd.f32 %v1233, %v1342
    %v1344 = vpop.f32.mrb[0].mxu0
    %v1345 = vpop.f32.mrb[0].mxu0
    %v1346 = vadd.f32 %v1236, %v1345
    %v1347 = vpop.f32.mrb[0].mxu0
    %1348 = vmatprep.mubr.bf16.mxu0 0
    %1349 = vmatmul.mubr.bf16.gmra.mrb[0].mxu0 %v1248
    %v1350 = vpop.f32.mrb[0].mxu0
    %v1351 = vadd.f32 %v1241, %v1350
    %v1352 = vpop.f32.mrb[0].mxu0
    %v1353 = vpop.f32.mrb[0].mxu0
    %v1354 = vpop.f32.mrb[0].mxu0
    %1355 = vdwg.mxu0
    %v1356 = vld [vmem:[#allocation3] sm:$0xe]
    %s1357 = scalar_lea.vmem [#allocation9], 128
    %v1358 = vld [vmem:[%s1357] sm:$0xf]
    %v1359 = vld [vmem:[%s1357 + $0x4] sm:$0xf]
    %v1360 = vld [vmem:[%s1357 + $0x8] sm:$0xf]
    %v1361 = vld [vmem:[%s1357 + $0xc] sm:$0xf]
    %v1362 = vld [vmem:[%s1357 + $0x10] sm:$0xf]
    %v1363 = vld [vmem:[%s1357 + $0x14] sm:$0xf]
    %v1364 = vld [vmem:[%s1357 + $0x18] sm:$0xf]
    %v1365 = vld [vmem:[%s1357 + $0x1c] sm:$0xf]
    %v1366 = vld [vmem:[%s1357 + $0x20] sm:$0xf]
    %v1367 = vld [vmem:[%s1357 + $0x24] sm:$0xf]
    %v1368 = vld [vmem:[%s1357 + $0x28] sm:$0xf]
    %v1369 = vld [vmem:[%s1357 + $0x2c] sm:$0xf]
    %v1370 = vld [vmem:[%s1357 + $0x30] sm:$0xf]
    %v1371 = vld [vmem:[%s1357 + $0x34] sm:$0xf]
    %v1372 = vld [vmem:[%s1357 + $0x38] sm:$0xf]
    %v1373 = vld [vmem:[%s1357 + $0x3c] sm:$0xf]
    %v1375 = vunpack.c.l.b16 %v1356
    %v1376 = vpack.c.b16 %v1109, %v1375
    %v1377 = vrot.slane %v1376, 1
    %v1378 = vrot.slane %v1114, 1
    %v1379 = vsel %vm684, %v1377, %v1378
    %v1380 = vrot.slane %v1115, 1
    %v1381 = vsel %vm684, %v1378, %v1380
    %v1401 = vunpack.c.l.b16 %v1358
    %v1402 = vunpack.c.l.b16 %v1359
    %v1403 = vunpack.c.l.b16 %v1360
    %v1404 = vunpack.c.l.b16 %v1361
    %v1405 = vunpack.c.l.b16 %v1362
    %v1406 = vunpack.c.l.b16 %v1363
    %v1407 = vunpack.c.l.b16 %v1364
    %v1408 = vunpack.c.l.b16 %v1365
    %v1409 = vunpack.c.l.b16 %v1366
    %v1410 = vunpack.c.l.b16 %v1367
    %v1411 = vunpack.c.l.b16 %v1368
    %v1412 = vunpack.c.l.b16 %v1369
    %v1413 = vunpack.c.l.b16 %v1370
    %v1414 = vunpack.c.l.b16 %v1371
    %v1415 = vunpack.c.l.b16 %v1372
    %v1416 = vunpack.c.l.b16 %v1373
    %v1417 = vpack.c.b16 %v1402, %v1401
    %v1418 = vpack.c.b16 %v1404, %v1403
    %v1419 = vpack.c.b16 %v1406, %v1405
    %v1420 = vpack.c.b16 %v1408, %v1407
    %v1421 = vpack.c.b16 %v1410, %v1409
    %v1422 = vpack.c.b16 %v1412, %v1411
    %v1423 = vpack.c.b16 %v1414, %v1413
    %v1424 = vpack.c.b16 %v1416, %v1415
    %1433 = vmatprep.subr.bf16.mxu0 0
    %1434 = vmatpush1.bf16.msra.mxu0 %v1417
    %1435 = vmatprep.subr.bf16.mxu0 0
    %1436 = vmatpush1.bf16.msra.mxu0 %v1418
    %1437 = vmatprep.subr.bf16.mxu0 0
    %1438 = vmatpush1.bf16.msra.mxu0 %v1419
    %1439 = vmatprep.subr.bf16.mxu0 0
    %1440 = vmatpush1.bf16.msra.mxu0 %v1420
    %1441 = vmatprep.subr.bf16.mxu0 0
    %1442 = vmatpush1.bf16.msra.mxu0 %v1421
    %1443 = vmatprep.subr.bf16.mxu0 0
    %1444 = vmatpush1.bf16.msra.mxu0 %v1422
    %1445 = vmatprep.subr.bf16.mxu0 0
    %1446 = vmatpush1.bf16.msra.mxu0 %v1423
    %1447 = vmatprep.subr.bf16.mxu0 0
    %1448 = vmatpush1.bf16.msra.mxu0 %v1424
    %1449 = vmatprep.subr.bf16.mxu0 0
    %1450 = vmatpush1.bf16.msra.mxu0 0
    %1451 = vmatprep.subr.bf16.mxu0 0
    %1452 = vmatpush1.bf16.msra.mxu0 0
    %1453 = vmatprep.subr.bf16.mxu0 0
    %1454 = vmatpush1.bf16.msra.mxu0 0
    %1455 = vmatprep.subr.bf16.mxu0 0
    %1456 = vmatpush1.bf16.msra.mxu0 0
    %1457 = vmatprep.subr.bf16.mxu0 0
    %1458 = vmatpush1.bf16.msra.mxu0 0
    %1459 = vmatprep.subr.bf16.mxu0 0
    %1460 = vmatpush1.bf16.msra.mxu0 0
    %1461 = vmatprep.subr.bf16.mxu0 0
    %1462 = vmatpush1.bf16.msra.mxu0 0
    %1463 = vmatprep.subr.bf16.mxu0 0
    %1464 = vmatpush1.bf16.msra.mxu0 0
    %1465 = vmatprep.mubr.bf16.mxu0 0
    %1466 = vmatmul.mubr.bf16.gmra.mrb[0].mxu0 %v1379
    %v1467 = vpop.f32.mrb[0].mxu0
    %v1468 = vadd.f32 0.0, %v1467
    %v1469 = vpop.f32.mrb[0].mxu0
    %v1470 = vpop.f32.mrb[0].mxu0
    %v1471 = vadd.f32 0.0, %v1470
    %v1472 = vpop.f32.mrb[0].mxu0
    %1473 = vmatprep.mubr.bf16.mxu0 0
    %1474 = vmatmul.mubr.bf16.gmra.mrb[0].mxu0 %v1381
    %v1475 = vpop.f32.mrb[0].mxu0
    %v1476 = vadd.f32 0.0, %v1475
    %v1477 = vpop.f32.mrb[0].mxu0
    %v1478 = vpop.f32.mrb[0].mxu0
    %v1479 = vadd.f32 0.0, %v1478
    %v1480 = vpop.f32.mrb[0].mxu0
    %1481 = vmatprep.mubr.bf16.mxu0 0
    %1482 = vmatmul.mubr.bf16.gmra.mrb[0].mxu0 %v1380
    %v1483 = vpop.f32.mrb[0].mxu0
    %v1484 = vadd.f32 0.0, %v1483
    %v1485 = vpop.f32.mrb[0].mxu0
    %v1486 = vpop.f32.mrb[0].mxu0
    %v1487 = vpop.f32.mrb[0].mxu0
    %1488 = vdwg.mxu0
    %v1489 = vadd.f32 %v1335, %v1468
    %v1490 = vadd.f32 %v1338, %v1471
    %v1491 = vadd.f32 %v1343, %v1476
    %v1492 = vadd.f32 %v1346, %v1479
    %v1493 = vadd.f32 %v1351, %v1484
    %v1494 = vadd.f32 %v1489, %v1490
    %v1495 = vrot.slane %v1494, 4
    %v1496 = vadd.f32 %v1494, %v1495
    %v1497 = vrot.slane %v1496, 2
    %v1498 = vadd.f32 %v1496, %v1497
    %v1499 = vrot.slane %v1498, 1
    %v1500 = vadd.f32 %v1498, %v1499
    %v1501 = vmul.f32 %v1489, %v1489
    %v1502 = vmul.f32 %v1490, %v1490
    %v1503 = vadd.f32 %v1501, %v1502
    %v1504 = vrot.slane %v1503, 4
    %v1505 = vadd.f32 %v1503, %v1504
    %v1506 = vrot.slane %v1505, 2
    %v1507 = vadd.f32 %v1505, %v1506
    %v1508 = vrot.slane %v1507, 1
    %v1509 = vadd.f32 %v1507, %v1508
    %v1510 = vsel %vm874, %v1500, %v1509
    %1511 = vrot.lane.b32.xlu0 %v1510, 8
    %v1512 = vpop.permute.xlu0 %1511
    %v1513 = vadd.f32 %v1510, %v1512
    %1514 = vrot.lane.b32.xlu0 %v1513, 16
    %v1515 = vpop.permute.xlu0 %1514
    %v1516 = vadd.f32 %v1513, %v1515
    %1517 = vrot.lane.b32.xlu0 %v1516, 32
    %v1518 = vpop.permute.xlu0 %1517
    %v1519 = vadd.f32 %v1516, %v1518
    %1520 = vrot.lane.b32.xlu0 %v1519, 64
    %v1521 = vpop.permute.xlu0 %1520
    %v1522 = vadd.f32 %v1519, %v1521
    %v1523 = vmul.f32 %v1522, 0.00390625
    %v1524 = vmul.f32 %v1523, %v1523
    %v1526 = vrot.slane %v1524, 7
    %v1528 = vsub.f32 %v1523, %v1526
    %v1529 = vlaneseq
    %v1530 = vshrl.u32 %v1529, 7
    %v1531 = vsub.s32 0, %v1530
    %v1532 = vrot.slane %v1523, %v1531
    %v1533 = vsub.f32 %v1489, %v1532
    %v1534 = vsub.f32 %v1490, %v1532
    %v1535 = vadd.f32 %v1528, 1e-05
    %v1536 = vrsqrt.pop %v1535
    %v1537 = vlaneseq
    %v1538 = vshrl.u32 %v1537, 7
    %v1539 = vsub.s32 1, %v1538
    %v1540 = vrot.slane %v1536, %v1539
    %v1541 = vmul.f32 %v1533, %v1540
    %v1542 = vmul.f32 %v1534, %v1540
    %v1543 = vmax.f32 %v1541, 0.0
    %v1544 = vmax.f32 %v1542, 0.0
    %1545 = vst [vmem:[#allocation10] sm:$0xff] %v1543
    %1546 = vst [vmem:[#allocation10 + $0x8] sm:$0xff] %v1544
    %v1550 = vrot.slane %v1491, 2
    %v1551 = vrot.slane %v1492, 2
    %v1552 = vsel %vm946, %v1550, %v1551
    %v1553 = vrot.slane %v1493, 2
    %v1554 = vsel %vm946, %v1551, %v1553
    %v1557 = vadd.f32 %v1552, %v1554
    %v1558 = vrot.slane %v1557, 4
    %v1559 = vadd.f32 %v1557, %v1558
    %v1560 = vrot.slane %v1559, 2
    %v1561 = vadd.f32 %v1559, %v1560
    %v1562 = vrot.slane %v1561, 1
    %v1563 = vadd.f32 %v1561, %v1562
    %v1564 = vmul.f32 %v1491, %v1491
    %v1565 = vmul.f32 %v1492, %v1492
    %v1566 = vmul.f32 %v1493, %v1493
    %v1570 = vrot.slane %v1564, 2
    %v1571 = vrot.slane %v1565, 2
    %v1572 = vsel %vm946, %v1570, %v1571
    %v1573 = vrot.slane %v1566, 2
    %v1574 = vsel %vm946, %v1571, %v1573
    %v1577 = vadd.f32 %v1572, %v1574
    %v1578 = vrot.slane %v1577, 4
    %v1579 = vadd.f32 %v1577, %v1578
    %v1580 = vrot.slane %v1579, 2
    %v1581 = vadd.f32 %v1579, %v1580
    %v1582 = vrot.slane %v1581, 1
    %v1583 = vadd.f32 %v1581, %v1582
    %v1584 = vsel %vm874, %v1563, %v1583
    %1585 = vrot.lane.b32.xlu0 %v1584, 8
    %v1586 = vpop.permute.xlu0 %1585
    %v1587 = vadd.f32 %v1584, %v1586
    %1588 = vrot.lane.b32.xlu0 %v1587, 16
    %v1589 = vpop.permute.xlu0 %1588
    %v1590 = vadd.f32 %v1587, %v1589
    %1591 = vrot.lane.b32.xlu0 %v1590, 32
    %v1592 = vpop.permute.xlu0 %1591
    %v1593 = vadd.f32 %v1590, %v1592
    %1594 = vrot.lane.b32.xlu0 %v1593, 64
    %v1595 = vpop.permute.xlu0 %1594
    %v1596 = vadd.f32 %v1593, %v1595
    %v1597 = vmul.f32 %v1596, 0.00390625
    %v1598 = vmul.f32 %v1597, %v1597
    %v1600 = vrot.slane %v1598, 7
    %v1602 = vsub.f32 %v1597, %v1600
    %v1603 = vlaneseq
    %v1604 = vshrl.u32 %v1603, 7
    %v1605 = vsub.s32 0, %v1604
    %v1606 = vrot.slane %v1597, %v1605
    %v1607 = vsub.f32 %v1491, %v1606
    %v1608 = vsub.f32 %v1492, %v1606
    %v1609 = vsub.f32 %v1493, %v1606
    %v1610 = vadd.f32 %v1602, 1e-05
    %v1611 = vrsqrt.pop %v1610
    %v1612 = vlaneseq
    %v1613 = vshrl.u32 %v1612, 7
    %v1614 = vsub.s32 1, %v1613
    %v1615 = vrot.slane %v1611, %v1614
    %v1616 = vmul.f32 %v1607, %v1615
    %v1617 = vmul.f32 %v1608, %v1615
    %v1618 = vmul.f32 %v1609, %v1615
    %v1619 = vmax.f32 %v1616, 0.0
    %v1620 = vmax.f32 %v1617, 0.0
    %v1621 = vmax.f32 %v1618, 0.0
    %s1622 = scalar_lea.vmem [#allocation10], 16
    %1623 = vst [vmem:[%s1622 - $0x2] sm:$0xfc] %v1619
    %1624 = vst [vmem:[%s1622 + $0x6] sm:$0xff] %v1620
    %1625 = vst [vmem:[%s1622 + $0xe] sm:$0x3] %v1621
    // Predicated region
    $region26: #{tpu_custom_call.1} parent=1 // pred_check
      _
    $region27: #{tpu_custom_call.1} parent=1 // pred_check_branch
      %1627 = sbr.rel (0) target = $region29
    $region28: #{tpu_custom_call.1} parent=1 // pred_region
      %s1629 = ssub.s32 512, 512
      %1630 = vsyncadd [#allocation6], %s1629
      %s1631 = sshll.u32 [#allocation10], 4
      %s1632 = int_to_ptr.vmem [resolvable:$true] %s1631
      %1637 = dma.vmem_to_hbm [thread:$0]  %s1632, 512, %s3, [#allocation6], 128, 128, 8
    $region29: #{tpu_custom_call.1} parent=1 // pred_fallthru
      _
    // Predicated region
    $region30: #{tpu_custom_call.1} parent=1 // pred_check
      _
    $region31: #{tpu_custom_call.1} parent=1 // pred_check_branch
      %1639 = sbr.rel (0) target = $region33
    $region32: #{tpu_custom_call.1} parent=1 // pred_region
      %1640 = dma.done [#allocation6], 512
    $region33: #{tpu_custom_call.1} parent=1 // pred_fallthru
      _
    %1641 = vsyncpa [#allocation5], 1
    %1642 = vsyncpa [#allocation8], 1
    %1643 = vsyncpa [#allocation6], 1

</llo_original>
